<compile_context>
chip_gen: v7x
topology: tpu7x:2x2x1
jax: 0.10.0
libtpu: 0.0.40
codegen_flags: <defaults>
</compile_context>

<pallas_src>
import numpy as np
import jax
import jax.numpy as jnp
from jax.experimental import pallas as pl
from jax.experimental.pallas import tpu as pltpu

HIDDEN = 768                    # self.hidden_size in the PyTorch module
EMB_DIM = 300                   # extra feature embeddings concatenated to CLS
EMB_PAD = 384                   # 300 padded to 3*128; bias "ones" column at 300
K_PAD = HIDDEN + EMB_PAD        # 1152 = 9*128 contraction width
L_PAD = 128                     # lane-dense output width (true labels sliced out)
SCALE = 1.0 / float(HIDDEN) ** 0.5
NEG_INF = -1e9


# ---------------------------------------------------------------------------
# Fused kernel: encoder CLS pooling + concat + Linear (dropout == identity)
# ---------------------------------------------------------------------------
def _fused_kernel(h_ref, mask_ref, emb_ref, w_ref, o_ref, x_ref):
    # h_ref:    (TB, S, D)      bf16 token hidden states for this batch tile
    # mask_ref: (TB, S)         f32 attention mask (1 keep, 0 pad)
    # emb_ref:  (TB, EMB_PAD)   f32 [embeddings | 1 | 0...]  (bias column at 300)
    # w_ref:    (K_PAD, L_PAD)  f32 fused [W1; W2; b; 0] weight, zero-padded cols
    # o_ref:    (TB, L_PAD)     f32 lane-dense output tile
    # x_ref:    (TB, K_PAD)     f32 VMEM scratch holding [cls | emb_pad]
    h = h_ref[...].astype(jnp.float32)      # elementwise math in f32 (v5e-safe)
    m = mask_ref[...]

    # CLS-query attention scores: tiny (TB, S) result -> VPU mul + lane reduce,
    # no MXU pass wasted on an M=1/N=S micro-matmul.
    q = h[:, 0, :]                                              # (TB, D)
    scores = jnp.sum(q[:, None, :] * h, axis=-1) * SCALE        # (TB, S)
    scores = jnp.where(m > 0.0, scores, jnp.float32(NEG_INF))
    scores = scores - jnp.max(scores, axis=-1, keepdims=True)
    p = jnp.exp(scores)
    p = p / jnp.sum(p, axis=-1, keepdims=True)                  # masked softmax

    cls = jnp.sum(p[:, :, None] * h, axis=1)                    # (TB, D)

    # Fused concat + Linear: x = [cls | emb | 1 | 0] in VMEM scratch, single
    # lane-dense (TB, 1152) @ (1152, 128) MXU matmul; bias folded into weight.
    x_ref[:, 0:HIDDEN] = cls
    x_ref[:, HIDDEN:K_PAD] = emb_ref[...]
    o_ref[...] = jnp.dot(x_ref[...], w_ref[...],
                         preferred_element_type=jnp.float32)


def fused_forward_core(h_bf16, mask_f32, emb_pad, w_full, *, tb=8):
    B, S, D = h_bf16.shape
    tb = min(tb, B)
    b_pad = pl.cdiv(B, tb) * tb
    if b_pad != B:
        pad = b_pad - B
        h_bf16 = jnp.pad(h_bf16, ((0, pad), (0, 0), (0, 0)))
        mask_f32 = jnp.pad(mask_f32, ((0, pad), (0, 0)))
        emb_pad = jnp.pad(emb_pad, ((0, pad), (0, 0)))

    grid = (b_pad // tb,)
    out = pl.pallas_call(
        _fused_kernel,
        out_shape=jax.ShapeDtypeStruct((b_pad, L_PAD), jnp.float32),
        grid_spec=pltpu.PrefetchScalarGridSpec(
            num_scalar_prefetch=0,
            grid=grid,
            in_specs=[
                pl.BlockSpec((tb, S, D), lambda i: (i, 0, 0)),      # h tile
                pl.BlockSpec((tb, S), lambda i: (i, 0)),            # mask tile
                pl.BlockSpec((tb, EMB_PAD), lambda i: (i, 0)),      # emb tile
                pl.BlockSpec((K_PAD, L_PAD), lambda i: (0, 0)),     # fused weight
            ],
            out_specs=pl.BlockSpec((tb, L_PAD), lambda i: (i, 0)),
            scratch_shapes=[pltpu.VMEM((tb, K_PAD), jnp.float32)],
        ),
        compiler_params=pltpu.CompilerParams(
            dimension_semantics=("parallel",),       # megacore / v7x 2-TC split
            vmem_limit_bytes=64 * 1024 * 1024,
        ),
    )(h_bf16, mask_f32, emb_pad, w_full)
    return out[:B]


# ---------------------------------------------------------------------------
# Parameter / input packing helpers (one-time, plain JAX)
# ---------------------------------------------------------------------------
def _build_fused_weight(w1, w2, b):
    # torch Linear weight (L, 1068) is represented here as w1=(768,L), w2=(300,L),
    # b=(L,); fuse into a single zero-padded (1152, 128) matrix with the bias in
    # the row addressed by the "ones" column of the padded embeddings.
    L = w1.shape[1]
    w = jnp.zeros((K_PAD, L_PAD), jnp.float32)
    w = w.at[:HIDDEN, :L].set(w1.astype(jnp.float32))
    w = w.at[HIDDEN:HIDDEN + EMB_DIM, :L].set(w2.astype(jnp.float32))
    w = w.at[HIDDEN + EMB_DIM, :L].set(b.reshape(-1).astype(jnp.float32))
    return w


def _pad_embeddings(emb):
    B = emb.shape[0]
    x = jnp.zeros((B, EMB_PAD), jnp.float32)
    x = x.at[:, :EMB_DIM].set(emb.astype(jnp.float32))
    x = x.at[:, EMB_DIM].set(1.0)               # bias "ones" column
    return x


# ---------------------------------------------------------------------------
# Full forward (eval mode: dropout == identity)
# ---------------------------------------------------------------------------
def model_forward(params, ids, mask, token_type_ids, embeddings, *, tb=8):
    # Embedding lookup (gather) stays in plain JAX glue.
    # TODO(synk): move this gather into the kernel via scalar prefetch + HBM DMA.
    h = (jnp.take(params["word_emb"], ids, axis=0)
         + jnp.take(params["type_emb"], token_type_ids, axis=0)).astype(jnp.bfloat16)
    emb_pad = _pad_embeddings(embeddings)
    w_full = _build_fused_weight(params["w1"], params["w2"], params["b"])
    out_pad = fused_forward_core(h, mask.astype(jnp.float32), emb_pad, w_full, tb=tb)
    return out_pad[:, :params["w1"].shape[1]]     # slice true label columns


def _reference_forward(params, ids, mask, token_type_ids, embeddings):
    h = (jnp.take(params["word_emb"], ids, axis=0)
         + jnp.take(params["type_emb"], token_type_ids, axis=0))
    h = h.astype(jnp.bfloat16).astype(jnp.float32)   # same bf16 quantization as kernel path
    q = h[:, 0, :]
    scores = jnp.einsum("bd,bsd->bs", q, h) * SCALE
    scores = jnp.where(mask.astype(jnp.float32) > 0.0, scores, NEG_INF)
    p = jax.nn.softmax(scores, axis=-1)
    cls = jnp.einsum("bs,bsd->bd", p, h)
    x = jnp.concatenate([cls, embeddings.astype(jnp.float32)], axis=1)
    w = jnp.concatenate([params["w1"], params["w2"]], axis=0)
    return x @ w + params["b"][None, :]


if __name__ == "__main__":
    B, S = 16, 8
    VOCAB, TYPE_VOCAB = 64, 2
    TARGET_LABELS = 4

    key = jax.random.PRNGKey(0)
    k_we, k_te, k_ids, k_emb, k_w1, k_w2, k_b = jax.random.split(key, 7)

    params = {
        "word_emb": 0.02 * jax.random.normal(k_we, (VOCAB, HIDDEN), jnp.float32),
        "type_emb": 0.02 * jax.random.normal(k_te, (TYPE_VOCAB, HIDDEN), jnp.float32),
        "w1": 0.02 * jax.random.normal(k_w1, (HIDDEN, TARGET_LABELS), jnp.float32),
        "w2": 0.02 * jax.random.normal(k_w2, (EMB_DIM, TARGET_LABELS), jnp.float32),
        "b": 0.02 * jax.random.normal(k_b, (TARGET_LABELS,), jnp.float32),
    }

    ids = jax.random.randint(k_ids, (B, S), 0, VOCAB, dtype=jnp.int32)
    mask = jnp.ones((B, S), jnp.int32).at[:, -2:].set(0)          # last 2 tokens padded
    token_type_ids = jnp.zeros((B, S), jnp.int32).at[:, S // 2:].set(1)
    embeddings = jax.random.normal(k_emb, (B, EMB_DIM), jnp.float32)

    out = jax.block_until_ready(
        model_forward(params, ids, mask, token_type_ids, embeddings, tb=8))
    ref = jax.block_until_ready(
        _reference_forward(params, ids, mask, token_type_ids, embeddings))

    np.testing.assert_allclose(np.asarray(out), np.asarray(ref),
                               rtol=2e-4, atol=2e-4)
    assert out.shape == (B, TARGET_LABELS)
    print("KERNEL_OK")
</pallas_src>

<mosaic_0001>
module attributes {stable_mosaic.version = 11 : i64} {
  func.func @_fused_kernel(%arg0: i32, %arg1: memref<8x8x768xbf16, #tpu.memory_space<vmem>>, %arg2: memref<8x8xf32, #tpu.memory_space<vmem>>, %arg3: memref<8x384xf32, #tpu.memory_space<vmem>>, %arg4: memref<1152x128xf32, #tpu.memory_space<vmem>>, %arg5: memref<8x128xf32, #tpu.memory_space<vmem>>, %arg6: memref<8x1152xf32, #tpu.memory_space<vmem>>) attributes {dimension_semantics = [#tpu.dimension_semantics<parallel>], iteration_bounds = array<i64: 2>, scalar_prefetch = 0 : i64, scratch_operands = 1 : i64, tpu.core_type = #tpu.core_type<tc>, window_params = [{transform_indices = @transform_0, window_bounds = array<i64: 8, 8, 768>}, {transform_indices = @transform_1, window_bounds = array<i64: 8, 8>}, {transform_indices = @transform_2, window_bounds = array<i64: 8, 384>}, {pipeline_mode = #tpu.pipeline_mode<synchronous>, transform_indices = @transform_3, window_bounds = array<i64: 1152, 128>}, {transform_indices = @transform_4, window_bounds = array<i64: 8, 128>}]} {
    %c0 = arith.constant 0 : index
    %c0_0 = arith.constant 0 : index
    %c0_1 = arith.constant 0 : index
    %0 = vector.load %arg1[%c0, %c0_0, %c0_1] : memref<8x8x768xbf16, #tpu.memory_space<vmem>>, vector<8x8x768xbf16>
    %1 = arith.extf %0 : vector<8x8x768xbf16> to vector<8x8x768xf32>
    %c0_2 = arith.constant 0 : index
    %c0_3 = arith.constant 0 : index
    %2 = vector.load %arg2[%c0_2, %c0_3] : memref<8x8xf32, #tpu.memory_space<vmem>>, vector<8x8xf32>
    %3 = vector.extract_strided_slice %1 {offsets = [0, 0, 0], sizes = [8, 1, 768], strides = [1, 1, 1]} : vector<8x8x768xf32> to vector<8x1x768xf32>
    %4 = vector.shape_cast %3 : vector<8x1x768xf32> to vector<8x768xf32>
    %5 = vector.shape_cast %4 : vector<8x768xf32> to vector<8x1x768xf32>
    %6 = vector.broadcast %5 : vector<8x1x768xf32> to vector<8x8x768xf32>
    %7 = arith.mulf %6, %1 : vector<8x8x768xf32>
    %cst = arith.constant dense<0.000000e+00> : vector<8x8xf32>
    %8 = vector.multi_reduction <add>, %7, %cst [2] : vector<8x8x768xf32> to vector<8x8xf32>
    %cst_4 = arith.constant 0.0360843912 : f32
    %9 = vector.broadcast %cst_4 : f32 to vector<8x8xf32>
    %10 = arith.mulf %8, %9 : vector<8x8xf32>
    %cst_5 = arith.constant 0.000000e+00 : f32
    %11 = vector.broadcast %cst_5 : f32 to vector<8x8xf32>
    %12 = arith.cmpf ogt, %2, %11 : vector<8x8xf32>
    %cst_6 = arith.constant -1.000000e+09 : f32
    %13 = vector.broadcast %cst_6 : f32 to vector<8x8xf32>
    %14 = arith.select %12, %10, %13 : vector<8x8xi1>, vector<8x8xf32>
    %cst_7 = arith.constant dense<0xFF800000> : vector<8xf32>
    %15 = vector.multi_reduction <maximumf>, %14, %cst_7 [1] : vector<8x8xf32> to vector<8xf32>
    %16 = vector.shape_cast %15 : vector<8xf32> to vector<8x1xf32>
    %17 = vector.broadcast %16 : vector<8x1xf32> to vector<8x8xf32>
    %18 = arith.subf %14, %17 : vector<8x8xf32>
    %19 = math.exp %18 : vector<8x8xf32>
    %cst_8 = arith.constant dense<0.000000e+00> : vector<8xf32>
    %20 = vector.multi_reduction <add>, %19, %cst_8 [1] : vector<8x8xf32> to vector<8xf32>
    %21 = vector.shape_cast %20 : vector<8xf32> to vector<8x1xf32>
    %22 = vector.broadcast %21 : vector<8x1xf32> to vector<8x8xf32>
    %23 = arith.divf %19, %22 : vector<8x8xf32>
    %24 = vector.shape_cast %23 : vector<8x8xf32> to vector<8x8x1xf32>
    %25 = vector.broadcast %24 : vector<8x8x1xf32> to vector<8x8x768xf32>
    %26 = arith.mulf %25, %1 : vector<8x8x768xf32>
    %cst_9 = arith.constant dense<0.000000e+00> : vector<8x768xf32>
    %27 = vector.multi_reduction <add>, %26, %cst_9 [1] : vector<8x8x768xf32> to vector<8x768xf32>
    %c0_10 = arith.constant 0 : index
    %c0_11 = arith.constant 0 : index
    %28 = vector.load %arg6[%c0_10, %c0_11] : memref<8x1152xf32, #tpu.memory_space<vmem>>, vector<8x768xf32>
    tpu.vector_store %arg6[%c0_10, %c0_11], %27 {strides = array<i32>} : memref<8x1152xf32, #tpu.memory_space<vmem>>, vector<8x768xf32>,
    %c0_12 = arith.constant 0 : index
    %c0_13 = arith.constant 0 : index
    %29 = vector.load %arg3[%c0_12, %c0_13] : memref<8x384xf32, #tpu.memory_space<vmem>>, vector<8x384xf32>
    %c0_14 = arith.constant 0 : index
    %c768 = arith.constant 768 : index
    %30 = vector.load %arg6[%c0_14, %c768] : memref<8x1152xf32, #tpu.memory_space<vmem>>, vector<8x384xf32>
    tpu.vector_store %arg6[%c0_14, %c768], %29 {strides = array<i32>} : memref<8x1152xf32, #tpu.memory_space<vmem>>, vector<8x384xf32>,
    %c0_15 = arith.constant 0 : index
    %c0_16 = arith.constant 0 : index
    %31 = vector.load %arg6[%c0_15, %c0_16] : memref<8x1152xf32, #tpu.memory_space<vmem>>, vector<8x1152xf32>
    %c0_17 = arith.constant 0 : index
    %c0_18 = arith.constant 0 : index
    %32 = vector.load %arg4[%c0_17, %c0_18] : memref<1152x128xf32, #tpu.memory_space<vmem>>, vector<1152x128xf32>
    %cst_19 = arith.constant dense<0.000000e+00> : vector<8x128xf32>
    %33 = tpu.matmul %31, %32, %cst_19 {dimension_numbers = #tpu.dot_dimension_numbers<[1], [0], [0], [1], [0, 0, 1, 1], [], []>} : vector<8x1152xf32>, vector<1152x128xf32>, vector<8x128xf32> -> vector<8x128xf32>
    %c0_20 = arith.constant 0 : index
    %c0_21 = arith.constant 0 : index
    %34 = vector.load %arg5[%c0_20, %c0_21] : memref<8x128xf32, #tpu.memory_space<vmem>>, vector<8x128xf32>
    tpu.vector_store %arg5[%c0_20, %c0_21], %33 {strides = array<i32>} : memref<8x128xf32, #tpu.memory_space<vmem>>, vector<8x128xf32>,
    return
  }
  func.func @transform_0(%arg0: i32) -> (i32, i32, i32) {
    %c0_i32 = arith.constant 0 : i32
    %c0_i32_0 = arith.constant 0 : i32
    %c0_i32_1 = arith.constant 0 : i32
    return %arg0, %c0_i32, %c0_i32_0 : i32, i32, i32
  }
  func.func @transform_1(%arg0: i32) -> (i32, i32) {
    %c0_i32 = arith.constant 0 : i32
    %c0_i32_0 = arith.constant 0 : i32
    return %arg0, %c0_i32 : i32, i32
  }
  func.func @transform_2(%arg0: i32) -> (i32, i32) {
    %c0_i32 = arith.constant 0 : i32
    %c0_i32_0 = arith.constant 0 : i32
    return %arg0, %c0_i32 : i32, i32
  }
  func.func @transform_3(%arg0: i32) -> (i32, i32) {
    %c0_i32 = arith.constant 0 : i32
    %c0_i32_0 = arith.constant 0 : i32
    %c0_i32_1 = arith.constant 0 : i32
    return %c0_i32, %c0_i32_0 : i32, i32
  }
  func.func @transform_4(%arg0: i32) -> (i32, i32) {
    %c0_i32 = arith.constant 0 : i32
    %c0_i32_0 = arith.constant 0 : i32
    return %arg0, %c0_i32 : i32, i32
  }
}

</mosaic_0001>

<llo_original>
// kernel: tpu_custom_call.1
$region0: #{tpu_custom_call.1}
  #allocation0 [shape = 'u32[]', space=smem, size = 0x4, offset = 0x4, fixed_abs, tag = 'smem constant byte address 0x4 - core index']
  #allocation1 [shape = 'u32[144,128]{1,0:T(1,128)}', space=vmem, size = 0x12000, scoped, tag = 'internal scratch']
  #allocation2 [shape = 'f32[8,1152]{1,0:T(8,128)}', space=vmem, size = 0x9000, scoped, tag = 'scratch operand']
  %s0 = inlined_call_operand.hbm [shape: bf16[16,8,768], index: 0, kind: input, shape index: {}]
  %s1 = inlined_call_operand.hbm [shape: f32[16,8], index: 1, kind: input, shape index: {}]
  %s2 = inlined_call_operand.hbm [shape: f32[16,384], index: 2, kind: input, shape index: {}]
  %s3 = inlined_call_operand.hbm [shape: f32[1152,128], index: 3, kind: input, shape index: {}]
  %s4 = inlined_call_operand.hbm [shape: f32[16,128], index: 4, kind: output, shape index: {}]
  %s5 = sld [smem:[#allocation0]]
  $region65: #{tpu_custom_call.1} parent=0
    _
  %s7 = ssub.s32 1, %s5
  %s8 = scalar_select 0, %s7, %s5
  $region1: #{tpu_custom_call.1} parent=0
    #allocation3 [shape = 'u8[196608]{0}', space=vmem, size = 0x30000, scoped, tag = 'input window, operand 0']
    #allocation4 [shape = 's32[2]{0}', space=sflag, size = 0x8, scoped, tag = 'scoped memory for tpu_custom_call.1']
    #allocation5 [shape = 's32[2]{0}', space=sflag, size = 0x8, scoped, tag = 'scoped memory for tpu_custom_call.1']
    #allocation6 [shape = 'u8[8192]{0}', space=vmem, size = 0x2000, scoped, tag = 'input window, operand 1']
    #allocation7 [shape = 's32[2]{0}', space=sflag, size = 0x8, scoped, tag = 'scoped memory for tpu_custom_call.1']
    #allocation8 [shape = 'u8[24576]{0}', space=vmem, size = 0x6000, scoped, tag = 'input window, operand 2']
    #allocation9 [shape = 'u8[589824]{0}', space=vmem, size = 0x90000, scoped, tag = 'input window, operand 3, single buffered']
    #allocation10 [shape = 's32[1]{0}', space=sflag, size = 0x4, scoped, tag = 'scoped memory for tpu_custom_call.1']
    #allocation11 [shape = 'u8[8192]{0}', space=vmem, size = 0x2000, scoped, tag = 'output window, operand 0']
    %9 = vsyncpa [#allocation4], 0
    %s10 = scalar_lea.sflag [#allocation4], 1
    %11 = vsyncpa %s10, 0
    %12 = vsyncpa [#allocation7], 0
    %s13 = scalar_lea.sflag [#allocation7], 1
    %14 = vsyncpa %s13, 0
    %15 = vsyncpa [#allocation10], 0
    %16 = vsyncpa [#allocation5], 0
    %s17 = scalar_lea.sflag [#allocation5], 1
    %18 = vsyncpa %s17, 0
    loop: start=0, step=1, limit=4
    $region2: #{tpu_custom_call.1} parent=1 // loop_pre_header
      _
    $region3: #{tpu_custom_call.1} parent=1 // loop_header
      %s20 = sphi 0, %s24
      %p21 = scmp.ge.s32.totalorder %s20, 4
      %s30 = sphi 0, %s32
      %s33 = sphi 0, %s30
      %s34 = sphi 0, %s33
      %s50 = sphi 0, %s34
      %s56 = sphi 0, %s58
      %s59 = sphi 0, %s56
      %s60 = sphi 0, %s59
      %s76 = sphi 0, %s60
      %s82 = sphi 0, %s84
      %s85 = sphi 0, %s82
      %s86 = sphi 0, %s85
      %s102 = sphi 0, %s86
      %s106 = sphi 0, %s106
      %s108 = sphi 0, %s106
      %s109 = sphi 0, %s108
      %s123 = sphi 0, %s109
      %s129 = sphi 0, %s131
      %s132 = sphi 0, %s129
      %s133 = sphi 0, %s132
      %s149 = sphi 0, %s133
    $region4: #{tpu_custom_call.1} parent=1 // loop_header_branch
      %23 = sbr.rel (%p21) target = $region8
    $region5: #{tpu_custom_call.1} parent=1 // loop_body
      %s25 = ssub.s32 %s20, 1
      %s26 = ssub.s32 %s20, 2
      %s27 = sadd.s32 %s20, 1
      %s28 = ssub.s32 %s20, %s27
      %p29 = scmp.eq.s32.totalorder %s28, 0
      %s31 = sadd.s32 %s30, 1
      %s32 = scalar_select %p29, %s30, %s31
      %p35 = pneg %p29
      %p36 = scmp.eq.s32.totalorder %s20, 1
      %p37 = por %p35, %p36
      %p38 = scmp.ne.s32.totalorder %s30, %s33
      %p39 = scmp.eq.s32.totalorder %s20, 0
      %p40 = por %p38, %p39
      %p41 = scmp.ne.s32.totalorder %s30, %s33
      %p42 = scmp.eq.s32.totalorder %s25, 1
      %p43 = por %p41, %p42
      %p44 = scmp.ne.s32.totalorder %s33, %s34
      %p45 = scmp.eq.s32.totalorder %s25, 0
      %p46 = por %p44, %p45
      %p47 = scmp.ne.s32.totalorder %s33, %s34
      %p48 = scmp.eq.s32.totalorder %s26, 1
      %p49 = por %p47, %p48
      %p51 = scmp.ne.s32.totalorder %s34, %s50
      %p52 = scmp.eq.s32.totalorder %s26, 0
      %p53 = por %p51, %p52
      %s54 = ssub.s32 %s20, %s27
      %p55 = scmp.eq.s32.totalorder %s54, 0
      %s57 = sadd.s32 %s56, 1
      %s58 = scalar_select %p55, %s56, %s57
      %p61 = pneg %p55
      %p62 = scmp.eq.s32.totalorder %s20, 1
      %p63 = por %p61, %p62
      %p64 = scmp.ne.s32.totalorder %s56, %s59
      %p65 = scmp.eq.s32.totalorder %s20, 0
      %p66 = por %p64, %p65
      %p67 = scmp.ne.s32.totalorder %s56, %s59
      %p68 = scmp.eq.s32.totalorder %s25, 1
      %p69 = por %p67, %p68
      %p70 = scmp.ne.s32.totalorder %s59, %s60
      %p71 = scmp.eq.s32.totalorder %s25, 0
      %p72 = por %p70, %p71
      %p73 = scmp.ne.s32.totalorder %s59, %s60
      %p74 = scmp.eq.s32.totalorder %s26, 1
      %p75 = por %p73, %p74
      %p77 = scmp.ne.s32.totalorder %s60, %s76
      %p78 = scmp.eq.s32.totalorder %s26, 0
      %p79 = por %p77, %p78
      %s80 = ssub.s32 %s20, %s27
      %p81 = scmp.eq.s32.totalorder %s80, 0
      %s83 = sadd.s32 %s82, 1
      %s84 = scalar_select %p81, %s82, %s83
      %p87 = pneg %p81
      %p88 = scmp.eq.s32.totalorder %s20, 1
      %p89 = por %p87, %p88
      %p90 = scmp.ne.s32.totalorder %s82, %s85
      %p91 = scmp.eq.s32.totalorder %s20, 0
      %p92 = por %p90, %p91
      %p93 = scmp.ne.s32.totalorder %s82, %s85
      %p94 = scmp.eq.s32.totalorder %s25, 1
      %p95 = por %p93, %p94
      %p96 = scmp.ne.s32.totalorder %s85, %s86
      %p97 = scmp.eq.s32.totalorder %s25, 0
      %p98 = por %p96, %p97
      %p99 = scmp.ne.s32.totalorder %s85, %s86
      %p100 = scmp.eq.s32.totalorder %s26, 1
      %p101 = por %p99, %p100
      %p103 = scmp.ne.s32.totalorder %s86, %s102
      %p104 = scmp.eq.s32.totalorder %s26, 0
      %p105 = por %p103, %p104
      %s107 = sadd.s32 %s106, 1
      %p110 = scmp.eq.s32.totalorder %s20, 1
      %p111 = scmp.ne.s32.totalorder %s106, %s108
      %p112 = scmp.eq.s32.totalorder %s20, 0
      %p113 = por %p111, %p112
      %p114 = scmp.ne.s32.totalorder %s106, %s108
      %p115 = scmp.eq.s32.totalorder %s25, 1
      %p116 = por %p114, %p115
      %p117 = scmp.ne.s32.totalorder %s108, %s109
      %p118 = scmp.eq.s32.totalorder %s25, 0
      %p119 = por %p117, %p118
      %p120 = scmp.ne.s32.totalorder %s108, %s109
      %p121 = scmp.eq.s32.totalorder %s26, 1
      %p122 = por %p120, %p121
      %p124 = scmp.ne.s32.totalorder %s109, %s123
      %p125 = scmp.eq.s32.totalorder %s26, 0
      %p126 = por %p124, %p125
      %s127 = ssub.s32 %s20, %s27
      %p128 = scmp.eq.s32.totalorder %s127, 0
      %s130 = sadd.s32 %s129, 1
      %s131 = scalar_select %p128, %s129, %s130
      %p134 = pneg %p128
      %p135 = scmp.eq.s32.totalorder %s20, 1
      %p136 = por %p134, %p135
      %p137 = scmp.ne.s32.totalorder %s129, %s132
      %p138 = scmp.eq.s32.totalorder %s20, 0
      %p139 = por %p137, %p138
      %p140 = scmp.ne.s32.totalorder %s129, %s132
      %p141 = scmp.eq.s32.totalorder %s25, 1
      %p142 = por %p140, %p141
      %p143 = scmp.ne.s32.totalorder %s132, %s133
      %p144 = scmp.eq.s32.totalorder %s25, 0
      %p145 = por %p143, %p144
      %p146 = scmp.ne.s32.totalorder %s132, %s133
      %p147 = scmp.eq.s32.totalorder %s26, 1
      %p148 = por %p146, %p147
      %p150 = scmp.ne.s32.totalorder %s133, %s149
      %p151 = scmp.eq.s32.totalorder %s26, 0
      %p152 = por %p150, %p151
      %p153 = scmp.le.s32.totalorder 1, %s20
      %p154 = scmp.lt.s32.totalorder %s20, 3
      %p155 = pnand %p153, %p154
      %p156 = pneg %p155
      // Predicated region
      $region9: #{tpu_custom_call.1} parent=5 // pred_check
        _
      $region10: #{tpu_custom_call.1} parent=5 // pred_check_branch
        %158 = sbr.rel (%p155) target = $region12
      $region11: #{tpu_custom_call.1} parent=5 // pred_region
        %s159 = ssub.s32 %s20, 1
        // Predicated region
        $region13: #{tpu_custom_call.1} parent=11 // pred_check
          %p160 = pneg %p119
        $region14: #{tpu_custom_call.1} parent=11 // pred_check_branch
          %162 = sbr.rel (%p160) target = $region16
        $region15: #{tpu_custom_call.1} parent=11 // pred_region
          %s164 = ssub.s32 18432, 18432
          %165 = vsyncadd [#allocation10], %s164
          %s166 = sshll.u32 [#allocation9], 4
          %s167 = int_to_ptr.vmem [resolvable:$true] %s166
          %172 = dma.hbm_to_vmem [thread:$0]  %s3, 18432, %s167, [#allocation10], 128, 128, 8
        $region16: #{tpu_custom_call.1} parent=11 // pred_fallthru
          _
      $region12: #{tpu_custom_call.1} parent=5 // pred_fallthru
        _
      %p173 = scmp.lt.s32.totalorder %s20, 2
      // Predicated region
      $region17: #{tpu_custom_call.1} parent=5 // pred_check
        %p174 = pneg %p173
      $region18: #{tpu_custom_call.1} parent=5 // pred_check_branch
        %176 = sbr.rel (%p174) target = $region20
      $region19: #{tpu_custom_call.1} parent=5 // pred_region
        // Predicated region
        $region21: #{tpu_custom_call.1} parent=19 // pred_check
          %p177 = pneg %p40
        $region22: #{tpu_custom_call.1} parent=19 // pred_check_branch
          %179 = sbr.rel (%p177) target = $region24
        $region23: #{tpu_custom_call.1} parent=19 // pred_region
          %s180 = sand.u32 %s30, 1
          %s181 = scalar_lea.sflag [#allocation4], %s180
          %s182 = sand.u32 %s30, 1
          %s183 = smul.addr %s182, 192
          %s184 = scalar_lea.vmem [#allocation3], %s183
          %s185 = smul.u32 8, %s20
          %s187 = ssub.s32 3072, 3072
          %188 = vsyncadd %s181, %s187
          %s189 = smul.addr %s185, 6
          %s190 = smul.addr %s189, 64
          %s191 = scalar_lea.hbm %s0, %s190
          %s192 = sshll.u32 %s184, 4
          %s193 = int_to_ptr.vmem [resolvable:$true] %s192
          %198 = dma.hbm_to_vmem [thread:$0]  %s191, 3072, %s193, %s181, 384, 384, 24
        $region24: #{tpu_custom_call.1} parent=19 // pred_fallthru
          _
        // Predicated region
        $region25: #{tpu_custom_call.1} parent=19 // pred_check
          %p199 = pneg %p66
        $region26: #{tpu_custom_call.1} parent=19 // pred_check_branch
          %201 = sbr.rel (%p199) target = $region28
        $region27: #{tpu_custom_call.1} parent=19 // pred_region
          %s202 = sand.u32 %s20, 1
          %s203 = scalar_lea.sflag [#allocation7], %s202
          %s204 = sand.u32 %s56, 1
          %s205 = smul.addr %s204, 8
          %s206 = scalar_lea.vmem [#allocation6], %s205
          %s208 = ssub.s32 128, 128
          %209 = vsyncadd %s203, %s208
          %s210 = smul.addr %s20, 128
          %s211 = scalar_lea.hbm %s1, %s210
          %s213 = sshll.u32 %s206, 4
          %s214 = int_to_ptr.vmem [resolvable:$true] %s213
          %216 = dma.hbm_to_vmem [thread:$0]  %s211, 128, %s214, %s203
        $region28: #{tpu_custom_call.1} parent=19 // pred_fallthru
          _
        // Predicated region
        $region29: #{tpu_custom_call.1} parent=19 // pred_check
          %p217 = pneg %p92
        $region30: #{tpu_custom_call.1} parent=19 // pred_check_branch
          %219 = sbr.rel (%p217) target = $region32
        $region31: #{tpu_custom_call.1} parent=19 // pred_region
          %s220 = sand.u32 %s20, 1
          %s221 = scalar_lea.sflag [#allocation7], %s220
          %s222 = sand.u32 %s82, 1
          %s223 = smul.addr %s222, 24
          %s224 = scalar_lea.vmem [#allocation8], %s223
          %s226 = ssub.s32 384, 384
          %227 = vsyncadd %s221, %s226
          %s228 = smul.addr %s20, 3
          %s229 = smul.addr %s228, 128
          %s230 = scalar_lea.hbm %s2, %s229
          %s232 = sshll.u32 %s224, 4
          %s233 = int_to_ptr.vmem [resolvable:$true] %s232
          %235 = dma.hbm_to_vmem [thread:$0]  %s230, 384, %s233, %s221
        $region32: #{tpu_custom_call.1} parent=19 // pred_fallthru
          _
      $region20: #{tpu_custom_call.1} parent=5 // pred_fallthru
        _
      %p236 = scmp.le.s32.totalorder 1, %s20
      %p237 = scmp.lt.s32.totalorder %s20, 3
      %p238 = pnand %p236, %p237
      %p239 = pneg %p238
      // Predicated region
      $region33: #{tpu_custom_call.1} parent=5 // pred_check
        _
      $region34: #{tpu_custom_call.1} parent=5 // pred_check_branch
        %241 = sbr.rel (%p238) target = $region36
      $region35: #{tpu_custom_call.1} parent=5 // pred_region
        %s242 = ssub.s32 %s20, 1
        %s243 = sand.u32 %s33, 1
        %s244 = scalar_lea.sflag [#allocation4], %s243
        %s245 = sand.u32 %s33, 1
        %s246 = smul.addr %s245, 192
        %s247 = scalar_lea.vmem [#allocation3], %s246
        // Predicated region
        $region37: #{tpu_custom_call.1} parent=35 // pred_check
          %p248 = pneg %p46
        $region38: #{tpu_custom_call.1} parent=35 // pred_check_branch
          %250 = sbr.rel (%p248) target = $region40
        $region39: #{tpu_custom_call.1} parent=35 // pred_region
          %251 = dma.done %s244, 3072
        $region40: #{tpu_custom_call.1} parent=35 // pred_fallthru
          _
        %s252 = sand.u32 %s25, 1
        %s253 = scalar_lea.sflag [#allocation7], %s252
        %s254 = sand.u32 %s59, 1
        %s255 = smul.addr %s254, 8
        %s256 = scalar_lea.vmem [#allocation6], %s255
        // Predicated region
        $region41: #{tpu_custom_call.1} parent=35 // pred_check
          %p257 = pneg %p72
        $region42: #{tpu_custom_call.1} parent=35 // pred_check_branch
          %259 = sbr.rel (%p257) target = $region44
        $region43: #{tpu_custom_call.1} parent=35 // pred_region
          %260 = dma.done %s253, 128
        $region44: #{tpu_custom_call.1} parent=35 // pred_fallthru
          _
        %s261 = sand.u32 %s25, 1
        %s262 = scalar_lea.sflag [#allocation7], %s261
        %s263 = sand.u32 %s85, 1
        %s264 = smul.addr %s263, 24
        %s265 = scalar_lea.vmem [#allocation8], %s264
        // Predicated region
        $region45: #{tpu_custom_call.1} parent=35 // pred_check
          %p266 = pneg %p98
        $region46: #{tpu_custom_call.1} parent=35 // pred_check_branch
          %268 = sbr.rel (%p266) target = $region48
        $region47: #{tpu_custom_call.1} parent=35 // pred_region
          %269 = dma.done %s262, 384
        $region48: #{tpu_custom_call.1} parent=35 // pred_fallthru
          _
        // Predicated region
        $region49: #{tpu_custom_call.1} parent=35 // pred_check
          %p270 = pneg %p119
        $region50: #{tpu_custom_call.1} parent=35 // pred_check_branch
          %272 = sbr.rel (%p270) target = $region52
        $region51: #{tpu_custom_call.1} parent=35 // pred_region
          %273 = dma.done [#allocation10], 18432
        $region52: #{tpu_custom_call.1} parent=35 // pred_fallthru
          _
        %s274 = sand.u32 %s33, 1
        %s275 = scalar_lea.sflag [#allocation4], %s274
        %s276 = sand.u32 %s33, 1
        %s277 = smul.addr %s276, 192
        %s278 = scalar_lea.vmem [#allocation3], %s277
        %p279 = pneg %p46
        %p280 = pneg %p43
        %s281 = sand.u32 %s25, 1
        %s282 = scalar_lea.sflag [#allocation7], %s281
        %s283 = sand.u32 %s59, 1
        %s284 = smul.addr %s283, 8
        %s285 = scalar_lea.vmem [#allocation6], %s284
        %p286 = pneg %p72
        %p287 = pneg %p69
        %s288 = sand.u32 %s25, 1
        %s289 = scalar_lea.sflag [#allocation7], %s288
        %s290 = sand.u32 %s85, 1
        %s291 = smul.addr %s290, 24
        %s292 = scalar_lea.vmem [#allocation8], %s291
        %p293 = pneg %p98
        %p294 = pneg %p95
        %p295 = pneg %p119
        %p296 = pneg %p116
        %p297 = pneg %p145
        %p298 = pneg %p142
        %s299 = sand.u32 %s132, 1
        %s300 = scalar_lea.sflag [#allocation5], %s299
        %s301 = sand.u32 %s132, 1
        %s302 = smul.addr %s301, 8
        %s303 = scalar_lea.vmem [#allocation11], %s302
        %s304 = smul.u32 8, %s25
        %v305 = vld [vmem:[%s247] sm:$0xff]
        %v306 = vld [vmem:[%s247 + $0x8] sm:$0xff]
        %v307 = vld [vmem:[%s247 + $0x10] sm:$0xff]
        %v308 = vld [vmem:[%s247 + $0x18] sm:$0xff]
        %v309 = vld [vmem:[%s247 + $0x20] sm:$0xff]
        %v310 = vld [vmem:[%s247 + $0x28] sm:$0xff]
        %v311 = vld [vmem:[%s247 + $0x30] sm:$0xff]
        %v312 = vld [vmem:[%s247 + $0x38] sm:$0xff]
        %v313 = vld [vmem:[%s247 + $0x40] sm:$0xff]
        %v314 = vld [vmem:[%s247 + $0x48] sm:$0xff]
        %v315 = vld [vmem:[%s247 + $0x50] sm:$0xff]
        %v316 = vld [vmem:[%s247 + $0x58] sm:$0xff]
        %v317 = vld [vmem:[%s247 + $0x60] sm:$0xff]
        %v318 = vld [vmem:[%s247 + $0x68] sm:$0xff]
        %v319 = vld [vmem:[%s247 + $0x70] sm:$0xff]
        %v320 = vld [vmem:[%s247 + $0x78] sm:$0xff]
        %v321 = vld [vmem:[%s247 + $0x80] sm:$0xff]
        %v322 = vld [vmem:[%s247 + $0x88] sm:$0xff]
        %v323 = vld [vmem:[%s247 + $0x90] sm:$0xff]
        %v324 = vld [vmem:[%s247 + $0x98] sm:$0xff]
        %v325 = vld [vmem:[%s247 + $0xa0] sm:$0xff]
        %v326 = vld [vmem:[%s247 + $0xa8] sm:$0xff]
        %v327 = vld [vmem:[%s247 + $0xb0] sm:$0xff]
        %v328 = vld [vmem:[%s247 + $0xb8] sm:$0xff]
        %v329 = vunpack.c.l.bf16 %v305
        %v330 = vunpack.c.h.bf16 %v305
        %v331 = vunpack.c.l.bf16 %v306
        %v332 = vunpack.c.h.bf16 %v306
        %v333 = vunpack.c.l.bf16 %v307
        %v334 = vunpack.c.h.bf16 %v307
        %v335 = vunpack.c.l.bf16 %v308
        %v336 = vunpack.c.h.bf16 %v308
        %v337 = vunpack.c.l.bf16 %v309
        %v338 = vunpack.c.h.bf16 %v309
        %v339 = vunpack.c.l.bf16 %v310
        %v340 = vunpack.c.h.bf16 %v310
        %v341 = vunpack.c.l.bf16 %v311
        %v342 = vunpack.c.h.bf16 %v311
        %v343 = vunpack.c.l.bf16 %v312
        %v344 = vunpack.c.h.bf16 %v312
        %v345 = vunpack.c.l.bf16 %v313
        %v346 = vunpack.c.h.bf16 %v313
        %v347 = vunpack.c.l.bf16 %v314
        %v348 = vunpack.c.h.bf16 %v314
        %v349 = vunpack.c.l.bf16 %v315
        %v350 = vunpack.c.h.bf16 %v315
        %v351 = vunpack.c.l.bf16 %v316
        %v352 = vunpack.c.h.bf16 %v316
        %v353 = vunpack.c.l.bf16 %v317
        %v354 = vunpack.c.h.bf16 %v317
        %v355 = vunpack.c.l.bf16 %v318
        %v356 = vunpack.c.h.bf16 %v318
        %v357 = vunpack.c.l.bf16 %v319
        %v358 = vunpack.c.h.bf16 %v319
        %v359 = vunpack.c.l.bf16 %v320
        %v360 = vunpack.c.h.bf16 %v320
        %v361 = vunpack.c.l.bf16 %v321
        %v362 = vunpack.c.h.bf16 %v321
        %v363 = vunpack.c.l.bf16 %v322
        %v364 = vunpack.c.h.bf16 %v322
        %v365 = vunpack.c.l.bf16 %v323
        %v366 = vunpack.c.h.bf16 %v323
        %v367 = vunpack.c.l.bf16 %v324
        %v368 = vunpack.c.h.bf16 %v324
        %v369 = vunpack.c.l.bf16 %v325
        %v370 = vunpack.c.h.bf16 %v325
        %v371 = vunpack.c.l.bf16 %v326
        %v372 = vunpack.c.h.bf16 %v326
        %v373 = vunpack.c.l.bf16 %v327
        %v374 = vunpack.c.h.bf16 %v327
        %v375 = vunpack.c.l.bf16 %v328
        %v376 = vunpack.c.h.bf16 %v328
        %v377 = vld [vmem:[%s256] sm:$0xff]
        %v378 = vlaneseq
        %v379 = vshrl.u32 %v378, 7
        %v380 = vsub.s32 0, %v379
        %v381 = vrot.slane %v329, %v380
        %v382 = vlaneseq
        %v383 = vshrl.u32 %v382, 7
        %v384 = vsub.s32 0, %v383
        %v385 = vrot.slane %v330, %v384
        %v386 = vlaneseq
        %v387 = vshrl.u32 %v386, 7
        %v388 = vsub.s32 0, %v387
        %v389 = vrot.slane %v331, %v388
        %v390 = vlaneseq
        %v391 = vshrl.u32 %v390, 7
        %v392 = vsub.s32 0, %v391
        %v393 = vrot.slane %v332, %v392
        %v394 = vlaneseq
        %v395 = vshrl.u32 %v394, 7
        %v396 = vsub.s32 0, %v395
        %v397 = vrot.slane %v333, %v396
        %v398 = vlaneseq
        %v399 = vshrl.u32 %v398, 7
        %v400 = vsub.s32 0, %v399
        %v401 = vrot.slane %v334, %v400
        %v402 = vlaneseq
        %v403 = vshrl.u32 %v402, 7
        %v404 = vsub.s32 0, %v403
        %v405 = vrot.slane %v335, %v404
        %v406 = vlaneseq
        %v407 = vshrl.u32 %v406, 7
        %v408 = vsub.s32 0, %v407
        %v409 = vrot.slane %v336, %v408
        %v410 = vlaneseq
        %v411 = vshrl.u32 %v410, 7
        %v412 = vsub.s32 0, %v411
        %v413 = vrot.slane %v337, %v412
        %v414 = vlaneseq
        %v415 = vshrl.u32 %v414, 7
        %v416 = vsub.s32 0, %v415
        %v417 = vrot.slane %v338, %v416
        %v418 = vlaneseq
        %v419 = vshrl.u32 %v418, 7
        %v420 = vsub.s32 0, %v419
        %v421 = vrot.slane %v339, %v420
        %v422 = vlaneseq
        %v423 = vshrl.u32 %v422, 7
        %v424 = vsub.s32 0, %v423
        %v425 = vrot.slane %v340, %v424
        %v426 = vlaneseq
        %v427 = vshrl.u32 %v426, 7
        %v428 = vsub.s32 0, %v427
        %v429 = vrot.slane %v341, %v428
        %v430 = vlaneseq
        %v431 = vshrl.u32 %v430, 7
        %v432 = vsub.s32 0, %v431
        %v433 = vrot.slane %v342, %v432
        %v434 = vlaneseq
        %v435 = vshrl.u32 %v434, 7
        %v436 = vsub.s32 0, %v435
        %v437 = vrot.slane %v343, %v436
        %v438 = vlaneseq
        %v439 = vshrl.u32 %v438, 7
        %v440 = vsub.s32 0, %v439
        %v441 = vrot.slane %v344, %v440
        %v442 = vlaneseq
        %v443 = vshrl.u32 %v442, 7
        %v444 = vsub.s32 0, %v443
        %v445 = vrot.slane %v345, %v444
        %v446 = vlaneseq
        %v447 = vshrl.u32 %v446, 7
        %v448 = vsub.s32 0, %v447
        %v449 = vrot.slane %v346, %v448
        %v450 = vlaneseq
        %v451 = vshrl.u32 %v450, 7
        %v452 = vsub.s32 0, %v451
        %v453 = vrot.slane %v347, %v452
        %v454 = vlaneseq
        %v455 = vshrl.u32 %v454, 7
        %v456 = vsub.s32 0, %v455
        %v457 = vrot.slane %v348, %v456
        %v458 = vlaneseq
        %v459 = vshrl.u32 %v458, 7
        %v460 = vsub.s32 0, %v459
        %v461 = vrot.slane %v349, %v460
        %v462 = vlaneseq
        %v463 = vshrl.u32 %v462, 7
        %v464 = vsub.s32 0, %v463
        %v465 = vrot.slane %v350, %v464
        %v466 = vlaneseq
        %v467 = vshrl.u32 %v466, 7
        %v468 = vsub.s32 0, %v467
        %v469 = vrot.slane %v351, %v468
        %v470 = vlaneseq
        %v471 = vshrl.u32 %v470, 7
        %v472 = vsub.s32 0, %v471
        %v473 = vrot.slane %v352, %v472
        %v474 = vlaneseq
        %v475 = vshrl.u32 %v474, 7
        %v476 = vsub.s32 0, %v475
        %v477 = vrot.slane %v353, %v476
        %v478 = vlaneseq
        %v479 = vshrl.u32 %v478, 7
        %v480 = vsub.s32 0, %v479
        %v481 = vrot.slane %v354, %v480
        %v482 = vlaneseq
        %v483 = vshrl.u32 %v482, 7
        %v484 = vsub.s32 0, %v483
        %v485 = vrot.slane %v355, %v484
        %v486 = vlaneseq
        %v487 = vshrl.u32 %v486, 7
        %v488 = vsub.s32 0, %v487
        %v489 = vrot.slane %v356, %v488
        %v490 = vlaneseq
        %v491 = vshrl.u32 %v490, 7
        %v492 = vsub.s32 0, %v491
        %v493 = vrot.slane %v357, %v492
        %v494 = vlaneseq
        %v495 = vshrl.u32 %v494, 7
        %v496 = vsub.s32 0, %v495
        %v497 = vrot.slane %v358, %v496
        %v498 = vlaneseq
        %v499 = vshrl.u32 %v498, 7
        %v500 = vsub.s32 0, %v499
        %v501 = vrot.slane %v359, %v500
        %v502 = vlaneseq
        %v503 = vshrl.u32 %v502, 7
        %v504 = vsub.s32 0, %v503
        %v505 = vrot.slane %v360, %v504
        %v506 = vlaneseq
        %v507 = vshrl.u32 %v506, 7
        %v508 = vsub.s32 0, %v507
        %v509 = vrot.slane %v361, %v508
        %v510 = vlaneseq
        %v511 = vshrl.u32 %v510, 7
        %v512 = vsub.s32 0, %v511
        %v513 = vrot.slane %v362, %v512
        %v514 = vlaneseq
        %v515 = vshrl.u32 %v514, 7
        %v516 = vsub.s32 0, %v515
        %v517 = vrot.slane %v363, %v516
        %v518 = vlaneseq
        %v519 = vshrl.u32 %v518, 7
        %v520 = vsub.s32 0, %v519
        %v521 = vrot.slane %v364, %v520
        %v522 = vlaneseq
        %v523 = vshrl.u32 %v522, 7
        %v524 = vsub.s32 0, %v523
        %v525 = vrot.slane %v365, %v524
        %v526 = vlaneseq
        %v527 = vshrl.u32 %v526, 7
        %v528 = vsub.s32 0, %v527
        %v529 = vrot.slane %v366, %v528
        %v530 = vlaneseq
        %v531 = vshrl.u32 %v530, 7
        %v532 = vsub.s32 0, %v531
        %v533 = vrot.slane %v367, %v532
        %v534 = vlaneseq
        %v535 = vshrl.u32 %v534, 7
        %v536 = vsub.s32 0, %v535
        %v537 = vrot.slane %v368, %v536
        %v538 = vlaneseq
        %v539 = vshrl.u32 %v538, 7
        %v540 = vsub.s32 0, %v539
        %v541 = vrot.slane %v369, %v540
        %v542 = vlaneseq
        %v543 = vshrl.u32 %v542, 7
        %v544 = vsub.s32 0, %v543
        %v545 = vrot.slane %v370, %v544
        %v546 = vlaneseq
        %v547 = vshrl.u32 %v546, 7
        %v548 = vsub.s32 0, %v547
        %v549 = vrot.slane %v371, %v548
        %v550 = vlaneseq
        %v551 = vshrl.u32 %v550, 7
        %v552 = vsub.s32 0, %v551
        %v553 = vrot.slane %v372, %v552
        %v554 = vlaneseq
        %v555 = vshrl.u32 %v554, 7
        %v556 = vsub.s32 0, %v555
        %v557 = vrot.slane %v373, %v556
        %v558 = vlaneseq
        %v559 = vshrl.u32 %v558, 7
        %v560 = vsub.s32 0, %v559
        %v561 = vrot.slane %v374, %v560
        %v562 = vlaneseq
        %v563 = vshrl.u32 %v562, 7
        %v564 = vsub.s32 0, %v563
        %v565 = vrot.slane %v375, %v564
        %v566 = vlaneseq
        %v567 = vshrl.u32 %v566, 7
        %v568 = vsub.s32 0, %v567
        %v569 = vrot.slane %v376, %v568
        %v570 = vmul.f32 %v381, %v329
        %v571 = vmul.f32 %v385, %v330
        %v572 = vmul.f32 %v389, %v331
        %v573 = vmul.f32 %v393, %v332
        %v574 = vmul.f32 %v397, %v333
        %v575 = vmul.f32 %v401, %v334
        %v576 = vmul.f32 %v405, %v335
        %v577 = vmul.f32 %v409, %v336
        %v578 = vmul.f32 %v413, %v337
        %v579 = vmul.f32 %v417, %v338
        %v580 = vmul.f32 %v421, %v339
        %v581 = vmul.f32 %v425, %v340
        %v582 = vmul.f32 %v429, %v341
        %v583 = vmul.f32 %v433, %v342
        %v584 = vmul.f32 %v437, %v343
        %v585 = vmul.f32 %v441, %v344
        %v586 = vmul.f32 %v445, %v345
        %v587 = vmul.f32 %v449, %v346
        %v588 = vmul.f32 %v453, %v347
        %v589 = vmul.f32 %v457, %v348
        %v590 = vmul.f32 %v461, %v349
        %v591 = vmul.f32 %v465, %v350
        %v592 = vmul.f32 %v469, %v351
        %v593 = vmul.f32 %v473, %v352
        %v594 = vmul.f32 %v477, %v353
        %v595 = vmul.f32 %v481, %v354
        %v596 = vmul.f32 %v485, %v355
        %v597 = vmul.f32 %v489, %v356
        %v598 = vmul.f32 %v493, %v357
        %v599 = vmul.f32 %v497, %v358
        %v600 = vmul.f32 %v501, %v359
        %v601 = vmul.f32 %v505, %v360
        %v602 = vmul.f32 %v509, %v361
        %v603 = vmul.f32 %v513, %v362
        %v604 = vmul.f32 %v517, %v363
        %v605 = vmul.f32 %v521, %v364
        %v606 = vmul.f32 %v525, %v365
        %v607 = vmul.f32 %v529, %v366
        %v608 = vmul.f32 %v533, %v367
        %v609 = vmul.f32 %v537, %v368
        %v610 = vmul.f32 %v541, %v369
        %v611 = vmul.f32 %v545, %v370
        %v612 = vmul.f32 %v549, %v371
        %v613 = vmul.f32 %v553, %v372
        %v614 = vmul.f32 %v557, %v373
        %v615 = vmul.f32 %v561, %v374
        %v616 = vmul.f32 %v565, %v375
        %v617 = vmul.f32 %v569, %v376
        %v618 = vadd.f32 %v570, %v571
        %v619 = vadd.f32 %v618, %v572
        %v620 = vadd.f32 %v619, %v573
        %v621 = vadd.f32 %v620, %v574
        %v622 = vadd.f32 %v621, %v575
        %623 = vadd.xlane.f32.xlu0 %v622
        %v624 = vpop.xlane.xlu0 %623
        %v625 = vadd.f32 %v576, %v577
        %v626 = vadd.f32 %v625, %v578
        %v627 = vadd.f32 %v626, %v579
        %v628 = vadd.f32 %v627, %v580
        %v629 = vadd.f32 %v628, %v581
        %630 = vadd.xlane.f32.xlu0 %v629
        %v631 = vpop.xlane.xlu0 %630
        %v632 = vadd.f32 %v582, %v583
        %v633 = vadd.f32 %v632, %v584
        %v634 = vadd.f32 %v633, %v585
        %v635 = vadd.f32 %v634, %v586
        %v636 = vadd.f32 %v635, %v587
        %637 = vadd.xlane.f32.xlu0 %v636
        %v638 = vpop.xlane.xlu0 %637
        %v639 = vadd.f32 %v588, %v589
        %v640 = vadd.f32 %v639, %v590
        %v641 = vadd.f32 %v640, %v591
        %v642 = vadd.f32 %v641, %v592
        %v643 = vadd.f32 %v642, %v593
        %644 = vadd.xlane.f32.xlu0 %v643
        %v645 = vpop.xlane.xlu0 %644
        %v646 = vadd.f32 %v594, %v595
        %v647 = vadd.f32 %v646, %v596
        %v648 = vadd.f32 %v647, %v597
        %v649 = vadd.f32 %v648, %v598
        %v650 = vadd.f32 %v649, %v599
        %651 = vadd.xlane.f32.xlu0 %v650
        %v652 = vpop.xlane.xlu0 %651
        %v653 = vadd.f32 %v600, %v601
        %v654 = vadd.f32 %v653, %v602
        %v655 = vadd.f32 %v654, %v603
        %v656 = vadd.f32 %v655, %v604
        %v657 = vadd.f32 %v656, %v605
        %658 = vadd.xlane.f32.xlu0 %v657
        %v659 = vpop.xlane.xlu0 %658
        %v660 = vadd.f32 %v606, %v607
        %v661 = vadd.f32 %v660, %v608
        %v662 = vadd.f32 %v661, %v609
        %v663 = vadd.f32 %v662, %v610
        %v664 = vadd.f32 %v663, %v611
        %665 = vadd.xlane.f32.xlu0 %v664
        %v666 = vpop.xlane.xlu0 %665
        %v667 = vadd.f32 %v612, %v613
        %v668 = vadd.f32 %v667, %v614
        %v669 = vadd.f32 %v668, %v615
        %v670 = vadd.f32 %v669, %v616
        %v671 = vadd.f32 %v670, %v617
        %672 = vadd.xlane.f32.xlu0 %v671
        %v673 = vpop.xlane.xlu0 %672
        %v674 = vmul.f32 %v624, 0.03608439
        %v675 = vmul.f32 %v631, 0.03608439
        %v676 = vmul.f32 %v638, 0.03608439
        %v677 = vmul.f32 %v645, 0.03608439
        %v678 = vmul.f32 %v652, 0.03608439
        %v679 = vmul.f32 %v659, 0.03608439
        %v680 = vmul.f32 %v666, 0.03608439
        %v681 = vmul.f32 %v673, 0.03608439
        %vm682 = vcmp.gt.f32.partialorder %v377, 0.0
        %v691 = vlaneseq
        %v692 = vand.u32 %v691, 127
        %v693 = vlaneseq
        %v694 = vshrl.u32 %v693, 7
        %v695 = vsub.s32 %v692, %v694
        %v696 = vrot.slane %v674, %v695
        %v697 = vlaneseq
        %v698 = vshrl.u32 %v697, 7
        %v699 = vsub.s32 %v692, %v698
        %v700 = vrot.slane %v675, %v699
        %v701 = vlaneseq
        %v702 = vshrl.u32 %v701, 7
        %v703 = vsub.s32 %v692, %v702
        %v704 = vrot.slane %v676, %v703
        %v705 = vlaneseq
        %v706 = vshrl.u32 %v705, 7
        %v707 = vsub.s32 %v692, %v706
        %v708 = vrot.slane %v677, %v707
        %v709 = vlaneseq
        %v710 = vshrl.u32 %v709, 7
        %v711 = vsub.s32 %v692, %v710
        %v712 = vrot.slane %v678, %v711
        %v713 = vlaneseq
        %v714 = vshrl.u32 %v713, 7
        %v715 = vsub.s32 %v692, %v714
        %v716 = vrot.slane %v679, %v715
        %v717 = vlaneseq
        %v718 = vshrl.u32 %v717, 7
        %v719 = vsub.s32 %v692, %v718
        %v720 = vrot.slane %v680, %v719
        %v721 = vlaneseq
        %v722 = vshrl.u32 %v721, 7
        %v723 = vsub.s32 %v692, %v722
        %v724 = vrot.slane %v681, %v723
        %vm725 = vcmask 1041409
        %v726 = vsel %vm725, %v700, %v696
        %vm727 = vcmask 1042434
        %v728 = vsel %vm727, %v704, %v726
        %vm729 = vcmask 1043459
        %v730 = vsel %vm729, %v708, %v728
        %vm731 = vcmask 1044484
        %v732 = vsel %vm731, %v712, %v730
        %vm733 = vcmask 1045509
        %v734 = vsel %vm733, %v716, %v732
        %vm735 = vcmask 1046534
        %v736 = vsel %vm735, %v720, %v734
        %vm737 = vcmask 1047559
        %v738 = vsel %vm737, %v724, %v736
        %v740 = vsel %vm682, %v738, -1e+09
        %vm741 = vcmask 64512
        %v742 = vsel %vm741, %v740, -inf
        %743 = vmax.xlane.f32.xlu0 %v742
        %v744 = vpop.xlane.xlu0 %743
        %v745 = vsub.f32 %v740, %v744
        %v746 = vmul.f32 %v745, 1.442695
        %v747 = vpow.pop %v746
        %v748 = vsel %vm741, %v747, 0.0
        %749 = vadd.xlane.f32.xlu0 %v748
        %v750 = vpop.xlane.xlu0 %749
        %v751 = vrcp.pop %v750
        %v752 = vmul.f32 %v747, %v751
        %v753 = vlaneseq
        %v754 = vshrl.u32 %v753, 7
        %v755 = vsub.s32 0, %v754
        %v756 = vrot.slane %v752, %v755
        %758 = vbcast.lane.b32.xlu0 %v756, 256
        %v759 = vpop.permute.xlu0 %758
        %v760 = vlaneseq
        %v761 = vshrl.u32 %v760, 7
        %v762 = vsub.s32 1, %v761
        %v763 = vrot.slane %v752, %v762
        %765 = vbcast.lane.b32.xlu0 %v763, 256
        %v766 = vpop.permute.xlu0 %765
        %v767 = vlaneseq
        %v768 = vshrl.u32 %v767, 7
        %v769 = vsub.s32 2, %v768
        %v770 = vrot.slane %v752, %v769
        %772 = vbcast.lane.b32.xlu0 %v770, 256
        %v773 = vpop.permute.xlu0 %772
        %v774 = vlaneseq
        %v775 = vshrl.u32 %v774, 7
        %v776 = vsub.s32 3, %v775
        %v777 = vrot.slane %v752, %v776
        %779 = vbcast.lane.b32.xlu0 %v777, 256
        %v780 = vpop.permute.xlu0 %779
        %v781 = vlaneseq
        %v782 = vshrl.u32 %v781, 7
        %v783 = vsub.s32 4, %v782
        %v784 = vrot.slane %v752, %v783
        %786 = vbcast.lane.b32.xlu0 %v784, 256
        %v787 = vpop.permute.xlu0 %786
        %v788 = vlaneseq
        %v789 = vshrl.u32 %v788, 7
        %v790 = vsub.s32 5, %v789
        %v791 = vrot.slane %v752, %v790
        %793 = vbcast.lane.b32.xlu0 %v791, 256
        %v794 = vpop.permute.xlu0 %793
        %v795 = vlaneseq
        %v796 = vshrl.u32 %v795, 7
        %v797 = vsub.s32 6, %v796
        %v798 = vrot.slane %v752, %v797
        %800 = vbcast.lane.b32.xlu0 %v798, 256
        %v801 = vpop.permute.xlu0 %800
        %v802 = vlaneseq
        %v803 = vshrl.u32 %v802, 7
        %v804 = vsub.s32 7, %v803
        %v805 = vrot.slane %v752, %v804
        %807 = vbcast.lane.b32.xlu0 %v805, 256
        %v808 = vpop.permute.xlu0 %807
        %v809 = vmul.f32 %v759, %v329
        %v810 = vmul.f32 %v759, %v330
        %v811 = vmul.f32 %v759, %v331
        %v812 = vmul.f32 %v759, %v332
        %v813 = vmul.f32 %v759, %v333
        %v814 = vmul.f32 %v759, %v334
        %v815 = vmul.f32 %v766, %v335
        %v816 = vmul.f32 %v766, %v336
        %v817 = vmul.f32 %v766, %v337
        %v818 = vmul.f32 %v766, %v338
        %v819 = vmul.f32 %v766, %v339
        %v820 = vmul.f32 %v766, %v340
        %v821 = vmul.f32 %v773, %v341
        %v822 = vmul.f32 %v773, %v342
        %v823 = vmul.f32 %v773, %v343
        %v824 = vmul.f32 %v773, %v344
        %v825 = vmul.f32 %v773, %v345
        %v826 = vmul.f32 %v773, %v346
        %v827 = vmul.f32 %v780, %v347
        %v828 = vmul.f32 %v780, %v348
        %v829 = vmul.f32 %v780, %v349
        %v830 = vmul.f32 %v780, %v350
        %v831 = vmul.f32 %v780, %v351
        %v832 = vmul.f32 %v780, %v352
        %v833 = vmul.f32 %v787, %v353
        %v834 = vmul.f32 %v787, %v354
        %v835 = vmul.f32 %v787, %v355
        %v836 = vmul.f32 %v787, %v356
        %v837 = vmul.f32 %v787, %v357
        %v838 = vmul.f32 %v787, %v358
        %v839 = vmul.f32 %v794, %v359
        %v840 = vmul.f32 %v794, %v360
        %v841 = vmul.f32 %v794, %v361
        %v842 = vmul.f32 %v794, %v362
        %v843 = vmul.f32 %v794, %v363
        %v844 = vmul.f32 %v794, %v364
        %v845 = vmul.f32 %v801, %v365
        %v846 = vmul.f32 %v801, %v366
        %v847 = vmul.f32 %v801, %v367
        %v848 = vmul.f32 %v801, %v368
        %v849 = vmul.f32 %v801, %v369
        %v850 = vmul.f32 %v801, %v370
        %v851 = vmul.f32 %v808, %v371
        %v852 = vmul.f32 %v808, %v372
        %v853 = vmul.f32 %v808, %v373
        %v854 = vmul.f32 %v808, %v374
        %v855 = vmul.f32 %v808, %v375
        %v856 = vmul.f32 %v808, %v376
        %v857 = vrot.slane %v809, 4
        %v858 = vadd.f32 %v809, %v857
        %v859 = vrot.slane %v858, 2
        %v860 = vadd.f32 %v858, %v859
        %v861 = vrot.slane %v860, 1
        %v862 = vadd.f32 %v860, %v861
        %v863 = vrot.slane %v810, 4
        %v864 = vadd.f32 %v810, %v863
        %v865 = vrot.slane %v864, 2
        %v866 = vadd.f32 %v864, %v865
        %v867 = vrot.slane %v866, 1
        %v868 = vadd.f32 %v866, %v867
        %v869 = vrot.slane %v811, 4
        %v870 = vadd.f32 %v811, %v869
        %v871 = vrot.slane %v870, 2
        %v872 = vadd.f32 %v870, %v871
        %v873 = vrot.slane %v872, 1
        %v874 = vadd.f32 %v872, %v873
        %v875 = vrot.slane %v812, 4
        %v876 = vadd.f32 %v812, %v875
        %v877 = vrot.slane %v876, 2
        %v878 = vadd.f32 %v876, %v877
        %v879 = vrot.slane %v878, 1
        %v880 = vadd.f32 %v878, %v879
        %v881 = vrot.slane %v813, 4
        %v882 = vadd.f32 %v813, %v881
        %v883 = vrot.slane %v882, 2
        %v884 = vadd.f32 %v882, %v883
        %v885 = vrot.slane %v884, 1
        %v886 = vadd.f32 %v884, %v885
        %v887 = vrot.slane %v814, 4
        %v888 = vadd.f32 %v814, %v887
        %v889 = vrot.slane %v888, 2
        %v890 = vadd.f32 %v888, %v889
        %v891 = vrot.slane %v890, 1
        %v892 = vadd.f32 %v890, %v891
        %v893 = vrot.slane %v815, 4
        %v894 = vadd.f32 %v815, %v893
        %v895 = vrot.slane %v894, 2
        %v896 = vadd.f32 %v894, %v895
        %v897 = vrot.slane %v896, 1
        %v898 = vadd.f32 %v896, %v897
        %v899 = vrot.slane %v816, 4
        %v900 = vadd.f32 %v816, %v899
        %v901 = vrot.slane %v900, 2
        %v902 = vadd.f32 %v900, %v901
        %v903 = vrot.slane %v902, 1
        %v904 = vadd.f32 %v902, %v903
        %v905 = vrot.slane %v817, 4
        %v906 = vadd.f32 %v817, %v905
        %v907 = vrot.slane %v906, 2
        %v908 = vadd.f32 %v906, %v907
        %v909 = vrot.slane %v908, 1
        %v910 = vadd.f32 %v908, %v909
        %v911 = vrot.slane %v818, 4
        %v912 = vadd.f32 %v818, %v911
        %v913 = vrot.slane %v912, 2
        %v914 = vadd.f32 %v912, %v913
        %v915 = vrot.slane %v914, 1
        %v916 = vadd.f32 %v914, %v915
        %v917 = vrot.slane %v819, 4
        %v918 = vadd.f32 %v819, %v917
        %v919 = vrot.slane %v918, 2
        %v920 = vadd.f32 %v918, %v919
        %v921 = vrot.slane %v920, 1
        %v922 = vadd.f32 %v920, %v921
        %v923 = vrot.slane %v820, 4
        %v924 = vadd.f32 %v820, %v923
        %v925 = vrot.slane %v924, 2
        %v926 = vadd.f32 %v924, %v925
        %v927 = vrot.slane %v926, 1
        %v928 = vadd.f32 %v926, %v927
        %v929 = vrot.slane %v821, 4
        %v930 = vadd.f32 %v821, %v929
        %v931 = vrot.slane %v930, 2
        %v932 = vadd.f32 %v930, %v931
        %v933 = vrot.slane %v932, 1
        %v934 = vadd.f32 %v932, %v933
        %v935 = vrot.slane %v822, 4
        %v936 = vadd.f32 %v822, %v935
        %v937 = vrot.slane %v936, 2
        %v938 = vadd.f32 %v936, %v937
        %v939 = vrot.slane %v938, 1
        %v940 = vadd.f32 %v938, %v939
        %v941 = vrot.slane %v823, 4
        %v942 = vadd.f32 %v823, %v941
        %v943 = vrot.slane %v942, 2
        %v944 = vadd.f32 %v942, %v943
        %v945 = vrot.slane %v944, 1
        %v946 = vadd.f32 %v944, %v945
        %v947 = vrot.slane %v824, 4
        %v948 = vadd.f32 %v824, %v947
        %v949 = vrot.slane %v948, 2
        %v950 = vadd.f32 %v948, %v949
        %v951 = vrot.slane %v950, 1
        %v952 = vadd.f32 %v950, %v951
        %v953 = vrot.slane %v825, 4
        %v954 = vadd.f32 %v825, %v953
        %v955 = vrot.slane %v954, 2
        %v956 = vadd.f32 %v954, %v955
        %v957 = vrot.slane %v956, 1
        %v958 = vadd.f32 %v956, %v957
        %v959 = vrot.slane %v826, 4
        %v960 = vadd.f32 %v826, %v959
        %v961 = vrot.slane %v960, 2
        %v962 = vadd.f32 %v960, %v961
        %v963 = vrot.slane %v962, 1
        %v964 = vadd.f32 %v962, %v963
        %v965 = vrot.slane %v827, 4
        %v966 = vadd.f32 %v827, %v965
        %v967 = vrot.slane %v966, 2
        %v968 = vadd.f32 %v966, %v967
        %v969 = vrot.slane %v968, 1
        %v970 = vadd.f32 %v968, %v969
        %v971 = vrot.slane %v828, 4
        %v972 = vadd.f32 %v828, %v971
        %v973 = vrot.slane %v972, 2
        %v974 = vadd.f32 %v972, %v973
        %v975 = vrot.slane %v974, 1
        %v976 = vadd.f32 %v974, %v975
        %v977 = vrot.slane %v829, 4
        %v978 = vadd.f32 %v829, %v977
        %v979 = vrot.slane %v978, 2
        %v980 = vadd.f32 %v978, %v979
        %v981 = vrot.slane %v980, 1
        %v982 = vadd.f32 %v980, %v981
        %v983 = vrot.slane %v830, 4
        %v984 = vadd.f32 %v830, %v983
        %v985 = vrot.slane %v984, 2
        %v986 = vadd.f32 %v984, %v985
        %v987 = vrot.slane %v986, 1
        %v988 = vadd.f32 %v986, %v987
        %v989 = vrot.slane %v831, 4
        %v990 = vadd.f32 %v831, %v989
        %v991 = vrot.slane %v990, 2
        %v992 = vadd.f32 %v990, %v991
        %v993 = vrot.slane %v992, 1
        %v994 = vadd.f32 %v992, %v993
        %v995 = vrot.slane %v832, 4
        %v996 = vadd.f32 %v832, %v995
        %v997 = vrot.slane %v996, 2
        %v998 = vadd.f32 %v996, %v997
        %v999 = vrot.slane %v998, 1
        %v1000 = vadd.f32 %v998, %v999
        %v1001 = vrot.slane %v833, 4
        %v1002 = vadd.f32 %v833, %v1001
        %v1003 = vrot.slane %v1002, 2
        %v1004 = vadd.f32 %v1002, %v1003
        %v1005 = vrot.slane %v1004, 1
        %v1006 = vadd.f32 %v1004, %v1005
        %v1007 = vrot.slane %v834, 4
        %v1008 = vadd.f32 %v834, %v1007
        %v1009 = vrot.slane %v1008, 2
        %v1010 = vadd.f32 %v1008, %v1009
        %v1011 = vrot.slane %v1010, 1
        %v1012 = vadd.f32 %v1010, %v1011
        %v1013 = vrot.slane %v835, 4
        %v1014 = vadd.f32 %v835, %v1013
        %v1015 = vrot.slane %v1014, 2
        %v1016 = vadd.f32 %v1014, %v1015
        %v1017 = vrot.slane %v1016, 1
        %v1018 = vadd.f32 %v1016, %v1017
        %v1019 = vrot.slane %v836, 4
        %v1020 = vadd.f32 %v836, %v1019
        %v1021 = vrot.slane %v1020, 2
        %v1022 = vadd.f32 %v1020, %v1021
        %v1023 = vrot.slane %v1022, 1
        %v1024 = vadd.f32 %v1022, %v1023
        %v1025 = vrot.slane %v837, 4
        %v1026 = vadd.f32 %v837, %v1025
        %v1027 = vrot.slane %v1026, 2
        %v1028 = vadd.f32 %v1026, %v1027
        %v1029 = vrot.slane %v1028, 1
        %v1030 = vadd.f32 %v1028, %v1029
        %v1031 = vrot.slane %v838, 4
        %v1032 = vadd.f32 %v838, %v1031
        %v1033 = vrot.slane %v1032, 2
        %v1034 = vadd.f32 %v1032, %v1033
        %v1035 = vrot.slane %v1034, 1
        %v1036 = vadd.f32 %v1034, %v1035
        %v1037 = vrot.slane %v839, 4
        %v1038 = vadd.f32 %v839, %v1037
        %v1039 = vrot.slane %v1038, 2
        %v1040 = vadd.f32 %v1038, %v1039
        %v1041 = vrot.slane %v1040, 1
        %v1042 = vadd.f32 %v1040, %v1041
        %v1043 = vrot.slane %v840, 4
        %v1044 = vadd.f32 %v840, %v1043
        %v1045 = vrot.slane %v1044, 2
        %v1046 = vadd.f32 %v1044, %v1045
        %v1047 = vrot.slane %v1046, 1
        %v1048 = vadd.f32 %v1046, %v1047
        %v1049 = vrot.slane %v841, 4
        %v1050 = vadd.f32 %v841, %v1049
        %v1051 = vrot.slane %v1050, 2
        %v1052 = vadd.f32 %v1050, %v1051
        %v1053 = vrot.slane %v1052, 1
        %v1054 = vadd.f32 %v1052, %v1053
        %v1055 = vrot.slane %v842, 4
        %v1056 = vadd.f32 %v842, %v1055
        %v1057 = vrot.slane %v1056, 2
        %v1058 = vadd.f32 %v1056, %v1057
        %v1059 = vrot.slane %v1058, 1
        %v1060 = vadd.f32 %v1058, %v1059
        %v1061 = vrot.slane %v843, 4
        %v1062 = vadd.f32 %v843, %v1061
        %v1063 = vrot.slane %v1062, 2
        %v1064 = vadd.f32 %v1062, %v1063
        %v1065 = vrot.slane %v1064, 1
        %v1066 = vadd.f32 %v1064, %v1065
        %v1067 = vrot.slane %v844, 4
        %v1068 = vadd.f32 %v844, %v1067
        %v1069 = vrot.slane %v1068, 2
        %v1070 = vadd.f32 %v1068, %v1069
        %v1071 = vrot.slane %v1070, 1
        %v1072 = vadd.f32 %v1070, %v1071
        %v1073 = vrot.slane %v845, 4
        %v1074 = vadd.f32 %v845, %v1073
        %v1075 = vrot.slane %v1074, 2
        %v1076 = vadd.f32 %v1074, %v1075
        %v1077 = vrot.slane %v1076, 1
        %v1078 = vadd.f32 %v1076, %v1077
        %v1079 = vrot.slane %v846, 4
        %v1080 = vadd.f32 %v846, %v1079
        %v1081 = vrot.slane %v1080, 2
        %v1082 = vadd.f32 %v1080, %v1081
        %v1083 = vrot.slane %v1082, 1
        %v1084 = vadd.f32 %v1082, %v1083
        %v1085 = vrot.slane %v847, 4
        %v1086 = vadd.f32 %v847, %v1085
        %v1087 = vrot.slane %v1086, 2
        %v1088 = vadd.f32 %v1086, %v1087
        %v1089 = vrot.slane %v1088, 1
        %v1090 = vadd.f32 %v1088, %v1089
        %v1091 = vrot.slane %v848, 4
        %v1092 = vadd.f32 %v848, %v1091
        %v1093 = vrot.slane %v1092, 2
        %v1094 = vadd.f32 %v1092, %v1093
        %v1095 = vrot.slane %v1094, 1
        %v1096 = vadd.f32 %v1094, %v1095
        %v1097 = vrot.slane %v849, 4
        %v1098 = vadd.f32 %v849, %v1097
        %v1099 = vrot.slane %v1098, 2
        %v1100 = vadd.f32 %v1098, %v1099
        %v1101 = vrot.slane %v1100, 1
        %v1102 = vadd.f32 %v1100, %v1101
        %v1103 = vrot.slane %v850, 4
        %v1104 = vadd.f32 %v850, %v1103
        %v1105 = vrot.slane %v1104, 2
        %v1106 = vadd.f32 %v1104, %v1105
        %v1107 = vrot.slane %v1106, 1
        %v1108 = vadd.f32 %v1106, %v1107
        %v1109 = vrot.slane %v851, 4
        %v1110 = vadd.f32 %v851, %v1109
        %v1111 = vrot.slane %v1110, 2
        %v1112 = vadd.f32 %v1110, %v1111
        %v1113 = vrot.slane %v1112, 1
        %v1114 = vadd.f32 %v1112, %v1113
        %v1115 = vrot.slane %v852, 4
        %v1116 = vadd.f32 %v852, %v1115
        %v1117 = vrot.slane %v1116, 2
        %v1118 = vadd.f32 %v1116, %v1117
        %v1119 = vrot.slane %v1118, 1
        %v1120 = vadd.f32 %v1118, %v1119
        %v1121 = vrot.slane %v853, 4
        %v1122 = vadd.f32 %v853, %v1121
        %v1123 = vrot.slane %v1122, 2
        %v1124 = vadd.f32 %v1122, %v1123
        %v1125 = vrot.slane %v1124, 1
        %v1126 = vadd.f32 %v1124, %v1125
        %v1127 = vrot.slane %v854, 4
        %v1128 = vadd.f32 %v854, %v1127
        %v1129 = vrot.slane %v1128, 2
        %v1130 = vadd.f32 %v1128, %v1129
        %v1131 = vrot.slane %v1130, 1
        %v1132 = vadd.f32 %v1130, %v1131
        %v1133 = vrot.slane %v855, 4
        %v1134 = vadd.f32 %v855, %v1133
        %v1135 = vrot.slane %v1134, 2
        %v1136 = vadd.f32 %v1134, %v1135
        %v1137 = vrot.slane %v1136, 1
        %v1138 = vadd.f32 %v1136, %v1137
        %v1139 = vrot.slane %v856, 4
        %v1140 = vadd.f32 %v856, %v1139
        %v1141 = vrot.slane %v1140, 2
        %v1142 = vadd.f32 %v1140, %v1141
        %v1143 = vrot.slane %v1142, 1
        %v1144 = vadd.f32 %v1142, %v1143
        %v1193 = vsel %vm725, %v898, %v862
        %v1194 = vsel %vm727, %v934, %v1193
        %v1195 = vsel %vm729, %v970, %v1194
        %v1196 = vsel %vm731, %v1006, %v1195
        %v1197 = vsel %vm733, %v1042, %v1196
        %v1198 = vsel %vm735, %v1078, %v1197
        %v1199 = vsel %vm737, %v1114, %v1198
        %v1200 = vsel %vm725, %v904, %v868
        %v1201 = vsel %vm727, %v940, %v1200
        %v1202 = vsel %vm729, %v976, %v1201
        %v1203 = vsel %vm731, %v1012, %v1202
        %v1204 = vsel %vm733, %v1048, %v1203
        %v1205 = vsel %vm735, %v1084, %v1204
        %v1206 = vsel %vm737, %v1120, %v1205
        %v1207 = vsel %vm725, %v910, %v874
        %v1208 = vsel %vm727, %v946, %v1207
        %v1209 = vsel %vm729, %v982, %v1208
        %v1210 = vsel %vm731, %v1018, %v1209
        %v1211 = vsel %vm733, %v1054, %v1210
        %v1212 = vsel %vm735, %v1090, %v1211
        %v1213 = vsel %vm737, %v1126, %v1212
        %v1214 = vsel %vm725, %v916, %v880
        %v1215 = vsel %vm727, %v952, %v1214
        %v1216 = vsel %vm729, %v988, %v1215
        %v1217 = vsel %vm731, %v1024, %v1216
        %v1218 = vsel %vm733, %v1060, %v1217
        %v1219 = vsel %vm735, %v1096, %v1218
        %v1220 = vsel %vm737, %v1132, %v1219
        %v1221 = vsel %vm725, %v922, %v886
        %v1222 = vsel %vm727, %v958, %v1221
        %v1223 = vsel %vm729, %v994, %v1222
        %v1224 = vsel %vm731, %v1030, %v1223
        %v1225 = vsel %vm733, %v1066, %v1224
        %v1226 = vsel %vm735, %v1102, %v1225
        %v1227 = vsel %vm737, %v1138, %v1226
        %v1228 = vsel %vm725, %v928, %v892
        %v1229 = vsel %vm727, %v964, %v1228
        %v1230 = vsel %vm729, %v1000, %v1229
        %v1231 = vsel %vm731, %v1036, %v1230
        %v1232 = vsel %vm733, %v1072, %v1231
        %v1233 = vsel %vm735, %v1108, %v1232
        %v1234 = vsel %vm737, %v1144, %v1233
        %1241 = vst [vmem:[#allocation2] sm:$0xff] %v1199
        %1242 = vst [vmem:[#allocation2 + $0x8] sm:$0xff] %v1206
        %1243 = vst [vmem:[#allocation2 + $0x10] sm:$0xff] %v1213
        %1244 = vst [vmem:[#allocation2 + $0x18] sm:$0xff] %v1220
        %1245 = vst [vmem:[#allocation2 + $0x20] sm:$0xff] %v1227
        %1246 = vst [vmem:[#allocation2 + $0x28] sm:$0xff] %v1234
        %v1247 = vld [vmem:[%s265] sm:$0xff]
        %v1248 = vld [vmem:[%s265 + $0x8] sm:$0xff]
        %v1249 = vld [vmem:[%s265 + $0x10] sm:$0xff]
        %1250 = vst [vmem:[#allocation2 + $0x30] sm:$0xff] %v1247
        %1251 = vst [vmem:[#allocation2 + $0x38] sm:$0xff] %v1248
        %1252 = vst [vmem:[#allocation2 + $0x40] sm:$0xff] %v1249
        %v1253 = vld [vmem:[#allocation2] sm:$0xff]
        %v1254 = vld [vmem:[#allocation2 + $0x8] sm:$0xff]
        %v1255 = vld [vmem:[#allocation2 + $0x10] sm:$0xff]
        %v1256 = vld [vmem:[#allocation2 + $0x18] sm:$0xff]
        %v1257 = vld [vmem:[#allocation2 + $0x20] sm:$0xff]
        %v1258 = vld [vmem:[#allocation2 + $0x28] sm:$0xff]
        %v1259 = vld [vmem:[#allocation2 + $0x30] sm:$0xff]
        %v1260 = vld [vmem:[#allocation2 + $0x38] sm:$0xff]
        %v1261 = vld [vmem:[#allocation2 + $0x40] sm:$0xff]
        %v1262 = vld [vmem:[#allocation9] sm:$0xff]
        %v1263 = vld [vmem:[#allocation9 + $0x8] sm:$0xff]
        %v1264 = vld [vmem:[#allocation9 + $0x10] sm:$0xff]
        %v1265 = vld [vmem:[#allocation9 + $0x18] sm:$0xff]
        %v1266 = vld [vmem:[#allocation9 + $0x20] sm:$0xff]
        %v1267 = vld [vmem:[#allocation9 + $0x28] sm:$0xff]
        %v1268 = vld [vmem:[#allocation9 + $0x30] sm:$0xff]
        %v1269 = vld [vmem:[#allocation9 + $0x38] sm:$0xff]
        %v1270 = vld [vmem:[#allocation9 + $0x40] sm:$0xff]
        %v1271 = vld [vmem:[#allocation9 + $0x48] sm:$0xff]
        %v1272 = vld [vmem:[#allocation9 + $0x50] sm:$0xff]
        %v1273 = vld [vmem:[#allocation9 + $0x58] sm:$0xff]
        %v1274 = vld [vmem:[#allocation9 + $0x60] sm:$0xff]
        %v1275 = vld [vmem:[#allocation9 + $0x68] sm:$0xff]
        %v1276 = vld [vmem:[#allocation9 + $0x70] sm:$0xff]
        %v1277 = vld [vmem:[#allocation9 + $0x78] sm:$0xff]
        %v1278 = vld [vmem:[#allocation9 + $0x80] sm:$0xff]
        %v1279 = vld [vmem:[#allocation9 + $0x88] sm:$0xff]
        %v1280 = vld [vmem:[#allocation9 + $0x90] sm:$0xff]
        %v1281 = vld [vmem:[#allocation9 + $0x98] sm:$0xff]
        %v1282 = vld [vmem:[#allocation9 + $0xa0] sm:$0xff]
        %v1283 = vld [vmem:[#allocation9 + $0xa8] sm:$0xff]
        %v1284 = vld [vmem:[#allocation9 + $0xb0] sm:$0xff]
        %v1285 = vld [vmem:[#allocation9 + $0xb8] sm:$0xff]
        %v1286 = vld [vmem:[#allocation9 + $0xc0] sm:$0xff]
        %v1287 = vld [vmem:[#allocation9 + $0xc8] sm:$0xff]
        %v1288 = vld [vmem:[#allocation9 + $0xd0] sm:$0xff]
        %v1289 = vld [vmem:[#allocation9 + $0xd8] sm:$0xff]
        %v1290 = vld [vmem:[#allocation9 + $0xe0] sm:$0xff]
        %v1291 = vld [vmem:[#allocation9 + $0xe8] sm:$0xff]
        %v1292 = vld [vmem:[#allocation9 + $0xf0] sm:$0xff]
        %v1293 = vld [vmem:[#allocation9 + $0xf8] sm:$0xff]
        %v1294 = vld [vmem:[#allocation9 + $0x100] sm:$0xff]
        %v1295 = vld [vmem:[#allocation9 + $0x108] sm:$0xff]
        %v1296 = vld [vmem:[#allocation9 + $0x110] sm:$0xff]
        %v1297 = vld [vmem:[#allocation9 + $0x118] sm:$0xff]
        %v1298 = vld [vmem:[#allocation9 + $0x120] sm:$0xff]
        %v1299 = vld [vmem:[#allocation9 + $0x128] sm:$0xff]
        %v1300 = vld [vmem:[#allocation9 + $0x130] sm:$0xff]
        %v1301 = vld [vmem:[#allocation9 + $0x138] sm:$0xff]
        %v1302 = vld [vmem:[#allocation9 + $0x140] sm:$0xff]
        %v1303 = vld [vmem:[#allocation9 + $0x148] sm:$0xff]
        %v1304 = vld [vmem:[#allocation9 + $0x150] sm:$0xff]
        %v1305 = vld [vmem:[#allocation9 + $0x158] sm:$0xff]
        %v1306 = vld [vmem:[#allocation9 + $0x160] sm:$0xff]
        %v1307 = vld [vmem:[#allocation9 + $0x168] sm:$0xff]
        %v1308 = vld [vmem:[#allocation9 + $0x170] sm:$0xff]
        %v1309 = vld [vmem:[#allocation9 + $0x178] sm:$0xff]
        %v1310 = vld [vmem:[#allocation9 + $0x180] sm:$0xff]
        %v1311 = vld [vmem:[#allocation9 + $0x188] sm:$0xff]
        %v1312 = vld [vmem:[#allocation9 + $0x190] sm:$0xff]
        %v1313 = vld [vmem:[#allocation9 + $0x198] sm:$0xff]
        %v1314 = vld [vmem:[#allocation9 + $0x1a0] sm:$0xff]
        %v1315 = vld [vmem:[#allocation9 + $0x1a8] sm:$0xff]
        %v1316 = vld [vmem:[#allocation9 + $0x1b0] sm:$0xff]
        %v1317 = vld [vmem:[#allocation9 + $0x1b8] sm:$0xff]
        %v1318 = vld [vmem:[#allocation9 + $0x1c0] sm:$0xff]
        %v1319 = vld [vmem:[#allocation9 + $0x1c8] sm:$0xff]
        %v1320 = vld [vmem:[#allocation9 + $0x1d0] sm:$0xff]
        %v1321 = vld [vmem:[#allocation9 + $0x1d8] sm:$0xff]
        %v1322 = vld [vmem:[#allocation9 + $0x1e0] sm:$0xff]
        %v1323 = vld [vmem:[#allocation9 + $0x1e8] sm:$0xff]
        %v1324 = vld [vmem:[#allocation9 + $0x1f0] sm:$0xff]
        %v1325 = vld [vmem:[#allocation9 + $0x1f8] sm:$0xff]
        %v1326 = vld [vmem:[#allocation9 + $0x200] sm:$0xff]
        %v1327 = vld [vmem:[#allocation9 + $0x208] sm:$0xff]
        %v1328 = vld [vmem:[#allocation9 + $0x210] sm:$0xff]
        %v1329 = vld [vmem:[#allocation9 + $0x218] sm:$0xff]
        %v1330 = vld [vmem:[#allocation9 + $0x220] sm:$0xff]
        %v1331 = vld [vmem:[#allocation9 + $0x228] sm:$0xff]
        %v1332 = vld [vmem:[#allocation9 + $0x230] sm:$0xff]
        %v1333 = vld [vmem:[#allocation9 + $0x238] sm:$0xff]
        %v1334 = vld [vmem:[#allocation9 + $0x240] sm:$0xff]
        %v1335 = vld [vmem:[#allocation9 + $0x248] sm:$0xff]
        %v1336 = vld [vmem:[#allocation9 + $0x250] sm:$0xff]
        %v1337 = vld [vmem:[#allocation9 + $0x258] sm:$0xff]
        %v1338 = vld [vmem:[#allocation9 + $0x260] sm:$0xff]
        %v1339 = vld [vmem:[#allocation9 + $0x268] sm:$0xff]
        %v1340 = vld [vmem:[#allocation9 + $0x270] sm:$0xff]
        %v1341 = vld [vmem:[#allocation9 + $0x278] sm:$0xff]
        %v1342 = vld [vmem:[#allocation9 + $0x280] sm:$0xff]
        %v1343 = vld [vmem:[#allocation9 + $0x288] sm:$0xff]
        %v1344 = vld [vmem:[#allocation9 + $0x290] sm:$0xff]
        %v1345 = vld [vmem:[#allocation9 + $0x298] sm:$0xff]
        %v1346 = vld [vmem:[#allocation9 + $0x2a0] sm:$0xff]
        %v1347 = vld [vmem:[#allocation9 + $0x2a8] sm:$0xff]
        %v1348 = vld [vmem:[#allocation9 + $0x2b0] sm:$0xff]
        %v1349 = vld [vmem:[#allocation9 + $0x2b8] sm:$0xff]
        %v1350 = vld [vmem:[#allocation9 + $0x2c0] sm:$0xff]
        %v1351 = vld [vmem:[#allocation9 + $0x2c8] sm:$0xff]
        %v1352 = vld [vmem:[#allocation9 + $0x2d0] sm:$0xff]
        %v1353 = vld [vmem:[#allocation9 + $0x2d8] sm:$0xff]
        %v1354 = vld [vmem:[#allocation9 + $0x2e0] sm:$0xff]
        %v1355 = vld [vmem:[#allocation9 + $0x2e8] sm:$0xff]
        %v1356 = vld [vmem:[#allocation9 + $0x2f0] sm:$0xff]
        %v1357 = vld [vmem:[#allocation9 + $0x2f8] sm:$0xff]
        %v1358 = vld [vmem:[#allocation9 + $0x300] sm:$0xff]
        %v1359 = vld [vmem:[#allocation9 + $0x308] sm:$0xff]
        %v1360 = vld [vmem:[#allocation9 + $0x310] sm:$0xff]
        %v1361 = vld [vmem:[#allocation9 + $0x318] sm:$0xff]
        %v1362 = vld [vmem:[#allocation9 + $0x320] sm:$0xff]
        %v1363 = vld [vmem:[#allocation9 + $0x328] sm:$0xff]
        %v1364 = vld [vmem:[#allocation9 + $0x330] sm:$0xff]
        %v1365 = vld [vmem:[#allocation9 + $0x338] sm:$0xff]
        %v1366 = vld [vmem:[#allocation9 + $0x340] sm:$0xff]
        %v1367 = vld [vmem:[#allocation9 + $0x348] sm:$0xff]
        %v1368 = vld [vmem:[#allocation9 + $0x350] sm:$0xff]
        %v1369 = vld [vmem:[#allocation9 + $0x358] sm:$0xff]
        %v1370 = vld [vmem:[#allocation9 + $0x360] sm:$0xff]
        %v1371 = vld [vmem:[#allocation9 + $0x368] sm:$0xff]
        %v1372 = vld [vmem:[#allocation9 + $0x370] sm:$0xff]
        %v1373 = vld [vmem:[#allocation9 + $0x378] sm:$0xff]
        %v1374 = vld [vmem:[#allocation9 + $0x380] sm:$0xff]
        %v1375 = vld [vmem:[#allocation9 + $0x388] sm:$0xff]
        %v1376 = vld [vmem:[#allocation9 + $0x390] sm:$0xff]
        %v1377 = vld [vmem:[#allocation9 + $0x398] sm:$0xff]
        %v1378 = vld [vmem:[#allocation9 + $0x3a0] sm:$0xff]
        %v1379 = vld [vmem:[#allocation9 + $0x3a8] sm:$0xff]
        %v1380 = vld [vmem:[#allocation9 + $0x3b0] sm:$0xff]
        %v1381 = vld [vmem:[#allocation9 + $0x3b8] sm:$0xff]
        %v1382 = vld [vmem:[#allocation9 + $0x3c0] sm:$0xff]
        %v1383 = vld [vmem:[#allocation9 + $0x3c8] sm:$0xff]
        %v1384 = vld [vmem:[#allocation9 + $0x3d0] sm:$0xff]
        %v1385 = vld [vmem:[#allocation9 + $0x3d8] sm:$0xff]
        %v1386 = vld [vmem:[#allocation9 + $0x3e0] sm:$0xff]
        %v1387 = vld [vmem:[#allocation9 + $0x3e8] sm:$0xff]
        %v1388 = vld [vmem:[#allocation9 + $0x3f0] sm:$0xff]
        %v1389 = vld [vmem:[#allocation9 + $0x3f8] sm:$0xff]
        %v1390 = vld [vmem:[#allocation9 + $0x400] sm:$0xff]
        %v1391 = vld [vmem:[#allocation9 + $0x408] sm:$0xff]
        %v1392 = vld [vmem:[#allocation9 + $0x410] sm:$0xff]
        %v1393 = vld [vmem:[#allocation9 + $0x418] sm:$0xff]
        %v1394 = vld [vmem:[#allocation9 + $0x420] sm:$0xff]
        %v1395 = vld [vmem:[#allocation9 + $0x428] sm:$0xff]
        %v1396 = vld [vmem:[#allocation9 + $0x430] sm:$0xff]
        %v1397 = vld [vmem:[#allocation9 + $0x438] sm:$0xff]
        %v1398 = vld [vmem:[#allocation9 + $0x440] sm:$0xff]
        %v1399 = vld [vmem:[#allocation9 + $0x448] sm:$0xff]
        %v1400 = vld [vmem:[#allocation9 + $0x450] sm:$0xff]
        %v1401 = vld [vmem:[#allocation9 + $0x458] sm:$0xff]
        %v1402 = vld [vmem:[#allocation9 + $0x460] sm:$0xff]
        %v1403 = vld [vmem:[#allocation9 + $0x468] sm:$0xff]
        %v1404 = vld [vmem:[#allocation9 + $0x470] sm:$0xff]
        %v1405 = vld [vmem:[#allocation9 + $0x478] sm:$0xff]
        %1406 = vmatprep.subr.mxu0 0.0
        %1407 = vmatpush1.msra.mxu0 %v1262
        %1408 = vmatprep.subr.mxu0 0.0
        %1409 = vmatpush1.msra.mxu0 %v1263
        %1410 = vmatprep.subr.mxu0 0.0
        %1411 = vmatpush1.msra.mxu0 %v1264
        %1412 = vmatprep.subr.mxu0 0.0
        %1413 = vmatpush1.msra.mxu0 %v1265
        %1414 = vmatprep.subr.mxu0 0.0
        %1415 = vmatpush1.msra.mxu0 %v1266
        %1416 = vmatprep.subr.mxu0 0.0
        %1417 = vmatpush1.msra.mxu0 %v1267
        %1418 = vmatprep.subr.mxu0 0.0
        %1419 = vmatpush1.msra.mxu0 %v1268
        %1420 = vmatprep.subr.mxu0 0.0
        %1421 = vmatpush1.msra.mxu0 %v1269
        %1422 = vmatprep.subr.mxu0 0.0
        %1423 = vmatpush1.msra.mxu0 %v1270
        %1424 = vmatprep.subr.mxu0 0.0
        %1425 = vmatpush1.msra.mxu0 %v1271
        %1426 = vmatprep.subr.mxu0 0.0
        %1427 = vmatpush1.msra.mxu0 %v1272
        %1428 = vmatprep.subr.mxu0 0.0
        %1429 = vmatpush1.msra.mxu0 %v1273
        %1430 = vmatprep.subr.mxu0 0.0
        %1431 = vmatpush1.msra.mxu0 %v1274
        %1432 = vmatprep.subr.mxu0 0.0
        %1433 = vmatpush1.msra.mxu0 %v1275
        %1434 = vmatprep.subr.mxu0 0.0
        %1435 = vmatpush1.msra.mxu0 %v1276
        %1436 = vmatprep.subr.mxu0 0.0
        %1437 = vmatpush1.msra.mxu0 %v1277
        %1438 = vmatprep.subr.mxu0 0.0
        %1439 = vmatpush1.msra.mxu0 %v1278
        %1440 = vmatprep.subr.mxu0 0.0
        %1441 = vmatpush1.msra.mxu0 %v1279
        %1442 = vmatprep.subr.mxu0 0.0
        %1443 = vmatpush1.msra.mxu0 %v1280
        %1444 = vmatprep.subr.mxu0 0.0
        %1445 = vmatpush1.msra.mxu0 %v1281
        %1446 = vmatprep.subr.mxu0 0.0
        %1447 = vmatpush1.msra.mxu0 %v1282
        %1448 = vmatprep.subr.mxu0 0.0
        %1449 = vmatpush1.msra.mxu0 %v1283
        %1450 = vmatprep.subr.mxu0 0.0
        %1451 = vmatpush1.msra.mxu0 %v1284
        %1452 = vmatprep.subr.mxu0 0.0
        %1453 = vmatpush1.msra.mxu0 %v1285
        %1454 = vmatprep.subr.mxu0 0.0
        %1455 = vmatpush1.msra.mxu0 %v1286
        %1456 = vmatprep.subr.mxu0 0.0
        %1457 = vmatpush1.msra.mxu0 %v1287
        %1458 = vmatprep.subr.mxu0 0.0
        %1459 = vmatpush1.msra.mxu0 %v1288
        %1460 = vmatprep.subr.mxu0 0.0
        %1461 = vmatpush1.msra.mxu0 %v1289
        %1462 = vmatprep.subr.mxu0 0.0
        %1463 = vmatpush1.msra.mxu0 %v1290
        %1464 = vmatprep.subr.mxu0 0.0
        %1465 = vmatpush1.msra.mxu0 %v1291
        %1466 = vmatprep.subr.mxu0 0.0
        %1467 = vmatpush1.msra.mxu0 %v1292
        %1468 = vmatprep.subr.mxu0 0.0
        %1469 = vmatpush1.msra.mxu0 %v1293
        %1470 = vmatprep.mubr.f32.mxu0 %v1254
        %1471 = vmatmul.mubr.f32.gmra.mrb[0].mxu0 %v1253
        %v1472 = vpop.f32.mrb[0].mxu0
        %v1473 = vadd.f32 0.0, %v1472
        %v1474 = vpop.f32.mrb[0].mxu0
        %1475 = vdwg.mxu0
        %1476 = vmatprep.subr.mxu0 0.0
        %1477 = vmatpush1.msra.mxu0 %v1294
        %1478 = vmatprep.subr.mxu0 0.0
        %1479 = vmatpush1.msra.mxu0 %v1295
        %1480 = vmatprep.subr.mxu0 0.0
        %1481 = vmatpush1.msra.mxu0 %v1296
        %1482 = vmatprep.subr.mxu0 0.0
        %1483 = vmatpush1.msra.mxu0 %v1297
        %1484 = vmatprep.subr.mxu0 0.0
        %1485 = vmatpush1.msra.mxu0 %v1298
        %1486 = vmatprep.subr.mxu0 0.0
        %1487 = vmatpush1.msra.mxu0 %v1299
        %1488 = vmatprep.subr.mxu0 0.0
        %1489 = vmatpush1.msra.mxu0 %v1300
        %1490 = vmatprep.subr.mxu0 0.0
        %1491 = vmatpush1.msra.mxu0 %v1301
        %1492 = vmatprep.subr.mxu0 0.0
        %1493 = vmatpush1.msra.mxu0 %v1302
        %1494 = vmatprep.subr.mxu0 0.0
        %1495 = vmatpush1.msra.mxu0 %v1303
        %1496 = vmatprep.subr.mxu0 0.0
        %1497 = vmatpush1.msra.mxu0 %v1304
        %1498 = vmatprep.subr.mxu0 0.0
        %1499 = vmatpush1.msra.mxu0 %v1305
        %1500 = vmatprep.subr.mxu0 0.0
        %1501 = vmatpush1.msra.mxu0 %v1306
        %1502 = vmatprep.subr.mxu0 0.0
        %1503 = vmatpush1.msra.mxu0 %v1307
        %1504 = vmatprep.subr.mxu0 0.0
        %1505 = vmatpush1.msra.mxu0 %v1308
        %1506 = vmatprep.subr.mxu0 0.0
        %1507 = vmatpush1.msra.mxu0 %v1309
        %1508 = vmatprep.subr.mxu0 0.0
        %1509 = vmatpush1.msra.mxu0 %v1310
        %1510 = vmatprep.subr.mxu0 0.0
        %1511 = vmatpush1.msra.mxu0 %v1311
        %1512 = vmatprep.subr.mxu0 0.0
        %1513 = vmatpush1.msra.mxu0 %v1312
        %1514 = vmatprep.subr.mxu0 0.0
        %1515 = vmatpush1.msra.mxu0 %v1313
        %1516 = vmatprep.subr.mxu0 0.0
        %1517 = vmatpush1.msra.mxu0 %v1314
        %1518 = vmatprep.subr.mxu0 0.0
        %1519 = vmatpush1.msra.mxu0 %v1315
        %1520 = vmatprep.subr.mxu0 0.0
        %1521 = vmatpush1.msra.mxu0 %v1316
        %1522 = vmatprep.subr.mxu0 0.0
        %1523 = vmatpush1.msra.mxu0 %v1317
        %1524 = vmatprep.subr.mxu0 0.0
        %1525 = vmatpush1.msra.mxu0 %v1318
        %1526 = vmatprep.subr.mxu0 0.0
        %1527 = vmatpush1.msra.mxu0 %v1319
        %1528 = vmatprep.subr.mxu0 0.0
        %1529 = vmatpush1.msra.mxu0 %v1320
        %1530 = vmatprep.subr.mxu0 0.0
        %1531 = vmatpush1.msra.mxu0 %v1321
        %1532 = vmatprep.subr.mxu0 0.0
        %1533 = vmatpush1.msra.mxu0 %v1322
        %1534 = vmatprep.subr.mxu0 0.0
        %1535 = vmatpush1.msra.mxu0 %v1323
        %1536 = vmatprep.subr.mxu0 0.0
        %1537 = vmatpush1.msra.mxu0 %v1324
        %1538 = vmatprep.subr.mxu0 0.0
        %1539 = vmatpush1.msra.mxu0 %v1325
        %1540 = vmatprep.mubr.f32.mxu0 %v1256
        %1541 = vmatmul.mubr.f32.gmra.mrb[0].mxu0 %v1255
        %v1542 = vpop.f32.mrb[0].mxu0
        %v1543 = vadd.f32 %v1473, %v1542
        %v1544 = vpop.f32.mrb[0].mxu0
        %1545 = vdwg.mxu0
        %1546 = vmatprep.subr.mxu0 0.0
        %1547 = vmatpush1.msra.mxu0 %v1326
        %1548 = vmatprep.subr.mxu0 0.0
        %1549 = vmatpush1.msra.mxu0 %v1327
        %1550 = vmatprep.subr.mxu0 0.0
        %1551 = vmatpush1.msra.mxu0 %v1328
        %1552 = vmatprep.subr.mxu0 0.0
        %1553 = vmatpush1.msra.mxu0 %v1329
        %1554 = vmatprep.subr.mxu0 0.0
        %1555 = vmatpush1.msra.mxu0 %v1330
        %1556 = vmatprep.subr.mxu0 0.0
        %1557 = vmatpush1.msra.mxu0 %v1331
        %1558 = vmatprep.subr.mxu0 0.0
        %1559 = vmatpush1.msra.mxu0 %v1332
        %1560 = vmatprep.subr.mxu0 0.0
        %1561 = vmatpush1.msra.mxu0 %v1333
        %1562 = vmatprep.subr.mxu0 0.0
        %1563 = vmatpush1.msra.mxu0 %v1334
        %1564 = vmatprep.subr.mxu0 0.0
        %1565 = vmatpush1.msra.mxu0 %v1335
        %1566 = vmatprep.subr.mxu0 0.0
        %1567 = vmatpush1.msra.mxu0 %v1336
        %1568 = vmatprep.subr.mxu0 0.0
        %1569 = vmatpush1.msra.mxu0 %v1337
        %1570 = vmatprep.subr.mxu0 0.0
        %1571 = vmatpush1.msra.mxu0 %v1338
        %1572 = vmatprep.subr.mxu0 0.0
        %1573 = vmatpush1.msra.mxu0 %v1339
        %1574 = vmatprep.subr.mxu0 0.0
        %1575 = vmatpush1.msra.mxu0 %v1340
        %1576 = vmatprep.subr.mxu0 0.0
        %1577 = vmatpush1.msra.mxu0 %v1341
        %1578 = vmatprep.subr.mxu0 0.0
        %1579 = vmatpush1.msra.mxu0 %v1342
        %1580 = vmatprep.subr.mxu0 0.0
        %1581 = vmatpush1.msra.mxu0 %v1343
        %1582 = vmatprep.subr.mxu0 0.0
        %1583 = vmatpush1.msra.mxu0 %v1344
        %1584 = vmatprep.subr.mxu0 0.0
        %1585 = vmatpush1.msra.mxu0 %v1345
        %1586 = vmatprep.subr.mxu0 0.0
        %1587 = vmatpush1.msra.mxu0 %v1346
        %1588 = vmatprep.subr.mxu0 0.0
        %1589 = vmatpush1.msra.mxu0 %v1347
        %1590 = vmatprep.subr.mxu0 0.0
        %1591 = vmatpush1.msra.mxu0 %v1348
        %1592 = vmatprep.subr.mxu0 0.0
        %1593 = vmatpush1.msra.mxu0 %v1349
        %1594 = vmatprep.subr.mxu0 0.0
        %1595 = vmatpush1.msra.mxu0 %v1350
        %1596 = vmatprep.subr.mxu0 0.0
        %1597 = vmatpush1.msra.mxu0 %v1351
        %1598 = vmatprep.subr.mxu0 0.0
        %1599 = vmatpush1.msra.mxu0 %v1352
        %1600 = vmatprep.subr.mxu0 0.0
        %1601 = vmatpush1.msra.mxu0 %v1353
        %1602 = vmatprep.subr.mxu0 0.0
        %1603 = vmatpush1.msra.mxu0 %v1354
        %1604 = vmatprep.subr.mxu0 0.0
        %1605 = vmatpush1.msra.mxu0 %v1355
        %1606 = vmatprep.subr.mxu0 0.0
        %1607 = vmatpush1.msra.mxu0 %v1356
        %1608 = vmatprep.subr.mxu0 0.0
        %1609 = vmatpush1.msra.mxu0 %v1357
        %1610 = vmatprep.mubr.f32.mxu0 %v1258
        %1611 = vmatmul.mubr.f32.gmra.mrb[0].mxu0 %v1257
        %v1612 = vpop.f32.mrb[0].mxu0
        %v1613 = vadd.f32 %v1543, %v1612
        %v1614 = vpop.f32.mrb[0].mxu0
        %1615 = vdwg.mxu0
        %1616 = vmatprep.subr.mxu0 0.0
        %1617 = vmatpush1.msra.mxu0 %v1358
        %1618 = vmatprep.subr.mxu0 0.0
        %1619 = vmatpush1.msra.mxu0 %v1359
        %1620 = vmatprep.subr.mxu0 0.0
        %1621 = vmatpush1.msra.mxu0 %v1360
        %1622 = vmatprep.subr.mxu0 0.0
        %1623 = vmatpush1.msra.mxu0 %v1361
        %1624 = vmatprep.subr.mxu0 0.0
        %1625 = vmatpush1.msra.mxu0 %v1362
        %1626 = vmatprep.subr.mxu0 0.0
        %1627 = vmatpush1.msra.mxu0 %v1363
        %1628 = vmatprep.subr.mxu0 0.0
        %1629 = vmatpush1.msra.mxu0 %v1364
        %1630 = vmatprep.subr.mxu0 0.0
        %1631 = vmatpush1.msra.mxu0 %v1365
        %1632 = vmatprep.subr.mxu0 0.0
        %1633 = vmatpush1.msra.mxu0 %v1366
        %1634 = vmatprep.subr.mxu0 0.0
        %1635 = vmatpush1.msra.mxu0 %v1367
        %1636 = vmatprep.subr.mxu0 0.0
        %1637 = vmatpush1.msra.mxu0 %v1368
        %1638 = vmatprep.subr.mxu0 0.0
        %1639 = vmatpush1.msra.mxu0 %v1369
        %1640 = vmatprep.subr.mxu0 0.0
        %1641 = vmatpush1.msra.mxu0 %v1370
        %1642 = vmatprep.subr.mxu0 0.0
        %1643 = vmatpush1.msra.mxu0 %v1371
        %1644 = vmatprep.subr.mxu0 0.0
        %1645 = vmatpush1.msra.mxu0 %v1372
        %1646 = vmatprep.subr.mxu0 0.0
        %1647 = vmatpush1.msra.mxu0 %v1373
        %1648 = vmatprep.subr.mxu0 0.0
        %1649 = vmatpush1.msra.mxu0 %v1374
        %1650 = vmatprep.subr.mxu0 0.0
        %1651 = vmatpush1.msra.mxu0 %v1375
        %1652 = vmatprep.subr.mxu0 0.0
        %1653 = vmatpush1.msra.mxu0 %v1376
        %1654 = vmatprep.subr.mxu0 0.0
        %1655 = vmatpush1.msra.mxu0 %v1377
        %1656 = vmatprep.subr.mxu0 0.0
        %1657 = vmatpush1.msra.mxu0 %v1378
        %1658 = vmatprep.subr.mxu0 0.0
        %1659 = vmatpush1.msra.mxu0 %v1379
        %1660 = vmatprep.subr.mxu0 0.0
        %1661 = vmatpush1.msra.mxu0 %v1380
        %1662 = vmatprep.subr.mxu0 0.0
        %1663 = vmatpush1.msra.mxu0 %v1381
        %1664 = vmatprep.subr.mxu0 0.0
        %1665 = vmatpush1.msra.mxu0 %v1382
        %1666 = vmatprep.subr.mxu0 0.0
        %1667 = vmatpush1.msra.mxu0 %v1383
        %1668 = vmatprep.subr.mxu0 0.0
        %1669 = vmatpush1.msra.mxu0 %v1384
        %1670 = vmatprep.subr.mxu0 0.0
        %1671 = vmatpush1.msra.mxu0 %v1385
        %1672 = vmatprep.subr.mxu0 0.0
        %1673 = vmatpush1.msra.mxu0 %v1386
        %1674 = vmatprep.subr.mxu0 0.0
        %1675 = vmatpush1.msra.mxu0 %v1387
        %1676 = vmatprep.subr.mxu0 0.0
        %1677 = vmatpush1.msra.mxu0 %v1388
        %1678 = vmatprep.subr.mxu0 0.0
        %1679 = vmatpush1.msra.mxu0 %v1389
        %1680 = vmatprep.mubr.f32.mxu0 %v1260
        %1681 = vmatmul.mubr.f32.gmra.mrb[0].mxu0 %v1259
        %v1682 = vpop.f32.mrb[0].mxu0
        %v1683 = vadd.f32 %v1613, %v1682
        %v1684 = vpop.f32.mrb[0].mxu0
        %1685 = vdwg.mxu0
        %1686 = vmatprep.subr.mxu0 0.0
        %1687 = vmatpush1.msra.mxu0 %v1390
        %1688 = vmatprep.subr.mxu0 0.0
        %1689 = vmatpush1.msra.mxu0 %v1391
        %1690 = vmatprep.subr.mxu0 0.0
        %1691 = vmatpush1.msra.mxu0 %v1392
        %1692 = vmatprep.subr.mxu0 0.0
        %1693 = vmatpush1.msra.mxu0 %v1393
        %1694 = vmatprep.subr.mxu0 0.0
        %1695 = vmatpush1.msra.mxu0 %v1394
        %1696 = vmatprep.subr.mxu0 0.0
        %1697 = vmatpush1.msra.mxu0 %v1395
        %1698 = vmatprep.subr.mxu0 0.0
        %1699 = vmatpush1.msra.mxu0 %v1396
        %1700 = vmatprep.subr.mxu0 0.0
        %1701 = vmatpush1.msra.mxu0 %v1397
        %1702 = vmatprep.subr.mxu0 0.0
        %1703 = vmatpush1.msra.mxu0 %v1398
        %1704 = vmatprep.subr.mxu0 0.0
        %1705 = vmatpush1.msra.mxu0 %v1399
        %1706 = vmatprep.subr.mxu0 0.0
        %1707 = vmatpush1.msra.mxu0 %v1400
        %1708 = vmatprep.subr.mxu0 0.0
        %1709 = vmatpush1.msra.mxu0 %v1401
        %1710 = vmatprep.subr.mxu0 0.0
        %1711 = vmatpush1.msra.mxu0 %v1402
        %1712 = vmatprep.subr.mxu0 0.0
        %1713 = vmatpush1.msra.mxu0 %v1403
        %1714 = vmatprep.subr.mxu0 0.0
        %1715 = vmatpush1.msra.mxu0 %v1404
        %1716 = vmatprep.subr.mxu0 0.0
        %1717 = vmatpush1.msra.mxu0 %v1405
        %1718 = vmatprep.subr.mxu0 0.0
        %1719 = vmatpush1.msra.mxu0 0.0
        %1720 = vmatprep.subr.mxu0 0.0
        %1721 = vmatpush1.msra.mxu0 0.0
        %1722 = vmatprep.subr.mxu0 0.0
        %1723 = vmatpush1.msra.mxu0 0.0
        %1724 = vmatprep.subr.mxu0 0.0
        %1725 = vmatpush1.msra.mxu0 0.0
        %1726 = vmatprep.subr.mxu0 0.0
        %1727 = vmatpush1.msra.mxu0 0.0
        %1728 = vmatprep.subr.mxu0 0.0
        %1729 = vmatpush1.msra.mxu0 0.0
        %1730 = vmatprep.subr.mxu0 0.0
        %1731 = vmatpush1.msra.mxu0 0.0
        %1732 = vmatprep.subr.mxu0 0.0
        %1733 = vmatpush1.msra.mxu0 0.0
        %1734 = vmatprep.subr.mxu0 0.0
        %1735 = vmatpush1.msra.mxu0 0.0
        %1736 = vmatprep.subr.mxu0 0.0
        %1737 = vmatpush1.msra.mxu0 0.0
        %1738 = vmatprep.subr.mxu0 0.0
        %1739 = vmatpush1.msra.mxu0 0.0
        %1740 = vmatprep.subr.mxu0 0.0
        %1741 = vmatpush1.msra.mxu0 0.0
        %1742 = vmatprep.subr.mxu0 0.0
        %1743 = vmatpush1.msra.mxu0 0.0
        %1744 = vmatprep.subr.mxu0 0.0
        %1745 = vmatpush1.msra.mxu0 0.0
        %1746 = vmatprep.subr.mxu0 0.0
        %1747 = vmatpush1.msra.mxu0 0.0
        %1748 = vmatprep.subr.mxu0 0.0
        %1749 = vmatpush1.msra.mxu0 0.0
        %1750 = vmatprep.mubr.f32.mxu0 0.0
        %1751 = vmatmul.mubr.f32.gmra.mrb[0].mxu0 %v1261
        %v1752 = vpop.f32.mrb[0].mxu0
        %v1753 = vadd.f32 %v1683, %v1752
        %v1754 = vpop.f32.mrb[0].mxu0
        %1755 = vdwg.mxu0
        %1756 = vst [vmem:[%s303] sm:$0xff] %v1753
        %s1757 = sand.u32 %s132, 1
        %s1758 = scalar_lea.sflag [#allocation5], %s1757
        %s1759 = sand.u32 %s132, 1
        %s1760 = smul.addr %s1759, 8
        %s1761 = scalar_lea.vmem [#allocation11], %s1760
        // Predicated region
        $region53: #{tpu_custom_call.1} parent=35 // pred_check
          %p1762 = pneg %p142
        $region54: #{tpu_custom_call.1} parent=35 // pred_check_branch
          %1764 = sbr.rel (%p1762) target = $region56
        $region55: #{tpu_custom_call.1} parent=35 // pred_region
          %s1766 = ssub.s32 128, 128
          %1767 = vsyncadd %s1758, %s1766
          %s1768 = smul.addr %s25, 128
          %s1769 = scalar_lea.hbm %s4, %s1768
          %s1771 = sshll.u32 %s1761, 4
          %s1772 = int_to_ptr.vmem [resolvable:$true] %s1771
          %1774 = dma.vmem_to_hbm [thread:$0]  %s1772, 128, %s1769, %s1758
        $region56: #{tpu_custom_call.1} parent=35 // pred_fallthru
          _
      $region36: #{tpu_custom_call.1} parent=5 // pred_fallthru
        _
      %p1775 = scmp.le.s32.totalorder 2, %s20
      // Predicated region
      $region57: #{tpu_custom_call.1} parent=5 // pred_check
        %p1776 = pneg %p1775
      $region58: #{tpu_custom_call.1} parent=5 // pred_check_branch
        %1778 = sbr.rel (%p1776) target = $region60
      $region59: #{tpu_custom_call.1} parent=5 // pred_region
        %s1779 = ssub.s32 %s20, 2
        // Predicated region
        $region61: #{tpu_custom_call.1} parent=59 // pred_check
          %p1780 = pneg %p148
        $region62: #{tpu_custom_call.1} parent=59 // pred_check_branch
          %1782 = sbr.rel (%p1780) target = $region64
        $region63: #{tpu_custom_call.1} parent=59 // pred_region
          %s1783 = sand.u32 %s133, 1
          %s1784 = scalar_lea.sflag [#allocation5], %s1783
          %s1785 = sand.u32 %s133, 1
          %s1786 = smul.addr %s1785, 8
          %s1787 = scalar_lea.vmem [#allocation11], %s1786
          %1788 = dma.done %s1784, 128
        $region64: #{tpu_custom_call.1} parent=59 // pred_fallthru
          _
      $region60: #{tpu_custom_call.1} parent=5 // pred_fallthru
        _
    $region6: #{tpu_custom_call.1} parent=1 // loop_footer
      %s24 = sadd.s32 1, %s20
    $region7: #{tpu_custom_call.1} parent=1 // loop_footer_branch
      %19 = sbr.rel target = $region3
    $region8: #{tpu_custom_call.1} parent=1 // loop_exit
      _
    %1789 = vsyncpa [#allocation4], 1
    %s1790 = scalar_lea.sflag [#allocation4], 1
    %1791 = vsyncpa %s1790, 1
    %1792 = vsyncpa [#allocation7], 1
    %s1793 = scalar_lea.sflag [#allocation7], 1
    %1794 = vsyncpa %s1793, 1
    %1795 = vsyncpa [#allocation10], 1
    %1796 = vsyncpa [#allocation5], 1
    %s1797 = scalar_lea.sflag [#allocation5], 1
    %1798 = vsyncpa %s1797, 1

</llo_original>
